<compile_context>
chip_gen: v7x
topology: tpu7x:2x2x1
jax: 0.10.0
libtpu: 0.0.40
codegen_flags: <defaults>
</compile_context>

<pallas_src>
import functools

import jax
import jax.numpy as jnp
from jax.experimental import pallas as pl
from jax.experimental.pallas import tpu as pltpu

_LANE = 128


def _round_up(x, m):
    return (x + m - 1) // m * m


def _physical_vmem_bytes():
    """Best-effort physical VMEM query; falls back to the smallest (v7x) size."""
    try:
        info = pltpu.get_tpu_info()
        cap = getattr(info, "vmem_capacity_bytes", None)
        if cap:
            return int(cap)
    except Exception:
        pass
    return 64 << 20  # conservative: v7x per-TensorCore VMEM


def _vmem_plan():
    """Return (vmem_limit_bytes for the compiler, tile working-set budget)."""
    phys = _physical_vmem_bytes()
    # ~3/4 of physical: v7x -> 48 MiB of 64, v5e/v6e -> 96 MiB of 128.  Well
    # above the 16/32 MiB scoped defaults, with headroom for compiler scratch.
    vmem_limit = int(min(phys * 3 // 4, 100 << 20))
    # Budget the pipelined working set at half of the scoped request (the
    # estimate below is rough, so keep a safety margin against VMEM OOM).
    return vmem_limit, vmem_limit // 2


def _vmem_need_bytes(th, Wp, W_out, Cp, Coutp, K, in_b, out_b):
    """Rough per-step VMEM footprint for a strip of `th` output rows."""
    main = 2 * th * Wp * Cp * in_b              # double-buffered input strip
    halo = 2 * (K - 1) * Wp * Cp * in_b         # double-buffered halo rows
    outb = 2 * th * W_out * Coutp * out_b       # double-buffered output strip
    work = ((th + K - 1) * Wp * Cp * 4          # f32 concatenated strip
            + th * W_out * Cp * 4               # f32 depthwise accumulator
            + th * W_out * Coutp * 4)           # f32 pointwise result
    wts = (K * K * Cp + Cp * Coutp) * 4         # weights (resident)
    return main + halo + outb + work + wts


def _choose_tile_h(H_out, Wp, W_out, Cp, Coutp, K, in_b, out_b, budget):
    """Largest divisor of H_out whose working set fits the VMEM budget."""
    divisors = [d for d in range(H_out, 0, -1) if H_out % d == 0]
    for th in divisors:
        if _vmem_need_bytes(th, Wp, W_out, Cp, Coutp, K, in_b, out_b) <= budget:
            return th
    return divisors[-1]  # 1-row strips as a last resort


def _make_sepconv_kernel(K):
    """Fused depthwise(KxK) + pointwise(1x1) kernel for one (batch, row-strip)."""
    KH = K - 1  # number of bottom-halo rows

    def kernel(*refs):
        x_ref = refs[0]                  # (1, TH, Wp, Cp)  main rows of the strip
        halo_refs = refs[1:1 + KH]       # KH x (1, 1, Wp, Cp) rows below the strip
        dw_ref = refs[1 + KH]            # (K*K, Cp)        depthwise weights
        pw_ref = refs[2 + KH]            # (Cp, Coutp)      pointwise weights
        o_ref = refs[3 + KH]             # (1, TH, W_out, Coutp)

        TH = x_ref.shape[1]
        Cp = x_ref.shape[3]
        W_out = o_ref.shape[2]
        Coutp = o_ref.shape[3]

        # Strip plus its bottom halo: (TH + K - 1, Wp, Cp), promoted to f32
        # exactly once (v5e has no bf16 VALU; f32 accumulation keeps parity
        # with the PyTorch module everywhere).
        rows = jnp.concatenate(
            [x_ref[0]] + [h[0] for h in halo_refs], axis=0
        ).astype(jnp.float32)

        # Depthwise KxK: f32 multiply-accumulate on the VPU.  One sublane-
        # shifted W-window per kw (K window slices total); the kh shifts are
        # leading-axis slices and cost no cross-lane shuffles.
        dw = dw_ref[...].astype(jnp.float32)
        acc = jnp.zeros((TH, W_out, Cp), jnp.float32)
        for kw in range(K):
            cols = rows[:, kw:kw + W_out, :]
            for kh in range(K):
                acc = acc + cols[kh:kh + TH] * dw[kh * K + kw]

        # Pointwise 1x1 == channel matmul on the MXU.  Feed operands in the
        # weights' native dtype (bf16 on v6e/v7x keeps full MXU throughput);
        # accumulate in f32 via preferred_element_type.
        lhs = acc.astype(pw_ref.dtype).reshape(TH * W_out, Cp)
        out = jnp.dot(lhs, pw_ref[...], preferred_element_type=jnp.float32)
        o_ref[...] = out.reshape(1, TH, W_out, Coutp).astype(o_ref.dtype)

    return kernel


@functools.partial(jax.jit, static_argnames=("padding",))
def separable_conv(x_nchw, dw_weight, pw_weight, *, padding=1):
    """x_nchw: (N, Cin, H, W); dw_weight: (Cin, 1, K, K); pw_weight: (Cout, Cin, 1, 1)."""
    N, Cin, H, W = x_nchw.shape
    Cout = pw_weight.shape[0]
    K = dw_weight.shape[2]
    p = padding

    Hp, Wp = H + 2 * p, W + 2 * p
    H_out = Hp - (K - 1)
    W_out = Wp - (K - 1)

    # Lane-dense channel padding (full 128-lane loads, unmasked output stores).
    Cp = _round_up(Cin, _LANE)
    Coutp = _round_up(Cout, _LANE)

    in_b = jnp.dtype(x_nchw.dtype).itemsize
    vmem_limit, budget = _vmem_plan()
    TH = _choose_tile_h(H_out, Wp, W_out, Cp, Coutp, K, in_b, in_b, budget)
    nH = H_out // TH

    # Single fused relayout pass: NCHW -> NHWC, spatial zero-pad (conv padding)
    # and channel zero-pad up to Cp (fused by XLA under jit).
    x_prep = jnp.pad(jnp.transpose(x_nchw, (0, 2, 3, 1)),
                     ((0, 0), (p, p), (p, p), (0, Cp - Cin)))

    # Weight relayout: depthwise (K*K, Cp), pointwise (Cp, Coutp); padded
    # channels carry zero weights so they contribute nothing.
    dw = jnp.transpose(dw_weight[:, 0, :, :], (1, 2, 0)).reshape(K * K, Cin)
    dw = jnp.pad(dw, ((0, 0), (0, Cp - Cin)))
    pw = jnp.pad(jnp.transpose(pw_weight[:, :, 0, 0], (1, 0)),
                 ((0, Cp - Cin), (0, Coutp - Cout)))

    # Main strip: padded rows [i*TH, i*TH + TH).  Halos: the K-1 rows just
    # below it, fetched as 1-row blocks (always in-bounds since the array is
    # already zero-padded by p = (K-1)/2 rows at the bottom).
    main_spec = pl.BlockSpec((1, TH, Wp, Cp), lambda n, i: (n, i, 0, 0))
    halo_specs = [
        pl.BlockSpec((1, 1, Wp, Cp),
                     (lambda n, i, j=j: (n, (i + 1) * TH + j, 0, 0)))
        for j in range(K - 1)
    ]

    out_nhwc = pl.pallas_call(
        _make_sepconv_kernel(K),
        out_shape=jax.ShapeDtypeStruct((N, H_out, W_out, Coutp), x_nchw.dtype),
        grid_spec=pltpu.PrefetchScalarGridSpec(
            num_scalar_prefetch=0,
            grid=(N, nH),
            in_specs=[main_spec] + halo_specs + [
                pl.BlockSpec((K * K, Cp), lambda n, i: (0, 0)),
                pl.BlockSpec((Cp, Coutp), lambda n, i: (0, 0)),
            ],
            out_specs=pl.BlockSpec((1, TH, W_out, Coutp),
                                   lambda n, i: (n, i, 0, 0)),
        ),
        compiler_params=pltpu.CompilerParams(
            # Both axes independent -> shards across v7x's 2 TensorCores even
            # at batch 1-2; harmless on single-core v5e/v6e.
            dimension_semantics=("parallel", "parallel"),
            vmem_limit_bytes=vmem_limit),
    )(x_prep, *([x_prep] * (K - 1)), dw, pw)

    # Drop channel padding and return to the module's NCHW contract.
    out = out_nhwc[..., :Cout]
    return jnp.transpose(out, (0, 3, 1, 2))


def _reference(x_nchw, dw_weight, pw_weight, *, padding=1):
    """Pure-JAX reference mirroring nn.Conv2d(groups=Cin) + nn.Conv2d(1x1)."""
    Cin = x_nchw.shape[1]
    y = jax.lax.conv_general_dilated(
        x_nchw, dw_weight,
        window_strides=(1, 1),
        padding=[(padding, padding), (padding, padding)],
        dimension_numbers=("NCHW", "OIHW", "NCHW"),
        feature_group_count=Cin)
    y = jax.lax.conv_general_dilated(
        y, pw_weight,
        window_strides=(1, 1),
        padding=[(0, 0), (0, 0)],
        dimension_numbers=("NCHW", "OIHW", "NCHW"))
    return y


if __name__ == "__main__":
    key = jax.random.PRNGKey(0)
    k_x, k_dw, k_pw = jax.random.split(key, 3)

    N, Cin, Cout, H, W, K, P = 2, 4, 8, 16, 16, 3, 1

    x = jax.random.normal(k_x, (N, Cin, H, W), dtype=jnp.float32)
    dw_weight = jax.random.normal(k_dw, (Cin, 1, K, K), dtype=jnp.float32) * 0.1
    pw_weight = jax.random.normal(k_pw, (Cout, Cin, 1, 1), dtype=jnp.float32) * 0.1

    out = jax.block_until_ready(separable_conv(x, dw_weight, pw_weight, padding=P))
    ref = jax.block_until_ready(_reference(x, dw_weight, pw_weight, padding=P))

    assert out.shape == (N, Cout, H, W), out.shape
    assert jnp.allclose(out, ref, atol=1e-5, rtol=1e-5)

    print("KERNEL_OK")
</pallas_src>

<mosaic_0001>
module attributes {stable_mosaic.version = 11 : i64} {
  func.func @kernel(%arg0: i32, %arg1: i32, %arg2: memref<1x16x18x128xf32, #tpu.memory_space<vmem>>, %arg3: memref<1x1x18x128xf32, #tpu.memory_space<vmem>>, %arg4: memref<1x1x18x128xf32, #tpu.memory_space<vmem>>, %arg5: memref<9x128xf32, #tpu.memory_space<vmem>>, %arg6: memref<128x128xf32, #tpu.memory_space<vmem>>, %arg7: memref<1x16x16x128xf32, #tpu.memory_space<vmem>>) attributes {dimension_semantics = [#tpu.dimension_semantics<parallel>, #tpu.dimension_semantics<parallel>], iteration_bounds = array<i64: 2, 1>, scalar_prefetch = 0 : i64, scratch_operands = 0 : i64, tpu.core_type = #tpu.core_type<tc>, window_params = [{transform_indices = @transform_0, window_bounds = array<i64: 1, 16, 18, 128>}, {transform_indices = @transform_1, window_bounds = array<i64: 1, 1, 18, 128>}, {transform_indices = @transform_2, window_bounds = array<i64: 1, 1, 18, 128>}, {pipeline_mode = #tpu.pipeline_mode<synchronous>, transform_indices = @transform_3, window_bounds = array<i64: 9, 128>}, {pipeline_mode = #tpu.pipeline_mode<synchronous>, transform_indices = @transform_4, window_bounds = array<i64: 128, 128>}, {transform_indices = @transform_5, window_bounds = array<i64: 1, 16, 16, 128>}]} {
    %c0 = arith.constant 0 : index
    %c0_0 = arith.constant 0 : index
    %c0_1 = arith.constant 0 : index
    %c0_2 = arith.constant 0 : index
    %0 = vector.load %arg2[%c0, %c0_0, %c0_1, %c0_2] : memref<1x16x18x128xf32, #tpu.memory_space<vmem>>, vector<1x16x18x128xf32>
    %1 = vector.shape_cast %0 : vector<1x16x18x128xf32> to vector<16x18x128xf32>
    %c0_3 = arith.constant 0 : index
    %c0_4 = arith.constant 0 : index
    %c0_5 = arith.constant 0 : index
    %c0_6 = arith.constant 0 : index
    %2 = vector.load %arg3[%c0_3, %c0_4, %c0_5, %c0_6] : memref<1x1x18x128xf32, #tpu.memory_space<vmem>>, vector<1x1x18x128xf32>
    %3 = vector.shape_cast %2 : vector<1x1x18x128xf32> to vector<1x18x128xf32>
    %c0_7 = arith.constant 0 : index
    %c0_8 = arith.constant 0 : index
    %c0_9 = arith.constant 0 : index
    %c0_10 = arith.constant 0 : index
    %4 = vector.load %arg4[%c0_7, %c0_8, %c0_9, %c0_10] : memref<1x1x18x128xf32, #tpu.memory_space<vmem>>, vector<1x1x18x128xf32>
    %5 = vector.shape_cast %4 : vector<1x1x18x128xf32> to vector<1x18x128xf32>
    %6 = tpu.concatenate %1, %3, %5 in 0 : vector<16x18x128xf32>, vector<1x18x128xf32>, vector<1x18x128xf32> -> vector<18x18x128xf32>
    %c0_11 = arith.constant 0 : index
    %c0_12 = arith.constant 0 : index
    %7 = vector.load %arg5[%c0_11, %c0_12] : memref<9x128xf32, #tpu.memory_space<vmem>>, vector<9x128xf32>
    %cst = arith.constant 0.000000e+00 : f32
    %8 = vector.broadcast %cst : f32 to vector<16x16x128xf32>
    %9 = vector.extract_strided_slice %6 {offsets = [0, 0, 0], sizes = [18, 16, 128], strides = [1, 1, 1]} : vector<18x18x128xf32> to vector<18x16x128xf32>
    %10 = vector.extract_strided_slice %9 {offsets = [0, 0, 0], sizes = [16, 16, 128], strides = [1, 1, 1]} : vector<18x16x128xf32> to vector<16x16x128xf32>
    %11 = vector.extract_strided_slice %7 {offsets = [0, 0], sizes = [1, 128], strides = [1, 1]} : vector<9x128xf32> to vector<1x128xf32>
    %12 = vector.shape_cast %11 : vector<1x128xf32> to vector<128xf32>
    %13 = vector.shape_cast %12 : vector<128xf32> to vector<1x1x128xf32>
    %14 = vector.broadcast %13 : vector<1x1x128xf32> to vector<16x16x128xf32>
    %15 = arith.mulf %10, %14 : vector<16x16x128xf32>
    %16 = arith.addf %8, %15 : vector<16x16x128xf32>
    %17 = vector.extract_strided_slice %9 {offsets = [1, 0, 0], sizes = [16, 16, 128], strides = [1, 1, 1]} : vector<18x16x128xf32> to vector<16x16x128xf32>
    %18 = vector.extract_strided_slice %7 {offsets = [3, 0], sizes = [1, 128], strides = [1, 1]} : vector<9x128xf32> to vector<1x128xf32>
    %19 = vector.shape_cast %18 : vector<1x128xf32> to vector<128xf32>
    %20 = vector.shape_cast %19 : vector<128xf32> to vector<1x1x128xf32>
    %21 = vector.broadcast %20 : vector<1x1x128xf32> to vector<16x16x128xf32>
    %22 = arith.mulf %17, %21 : vector<16x16x128xf32>
    %23 = arith.addf %16, %22 : vector<16x16x128xf32>
    %24 = vector.extract_strided_slice %9 {offsets = [2, 0, 0], sizes = [16, 16, 128], strides = [1, 1, 1]} : vector<18x16x128xf32> to vector<16x16x128xf32>
    %25 = vector.extract_strided_slice %7 {offsets = [6, 0], sizes = [1, 128], strides = [1, 1]} : vector<9x128xf32> to vector<1x128xf32>
    %26 = vector.shape_cast %25 : vector<1x128xf32> to vector<128xf32>
    %27 = vector.shape_cast %26 : vector<128xf32> to vector<1x1x128xf32>
    %28 = vector.broadcast %27 : vector<1x1x128xf32> to vector<16x16x128xf32>
    %29 = arith.mulf %24, %28 : vector<16x16x128xf32>
    %30 = arith.addf %23, %29 : vector<16x16x128xf32>
    %31 = vector.extract_strided_slice %6 {offsets = [0, 1, 0], sizes = [18, 16, 128], strides = [1, 1, 1]} : vector<18x18x128xf32> to vector<18x16x128xf32>
    %32 = vector.extract_strided_slice %31 {offsets = [0, 0, 0], sizes = [16, 16, 128], strides = [1, 1, 1]} : vector<18x16x128xf32> to vector<16x16x128xf32>
    %33 = vector.extract_strided_slice %7 {offsets = [1, 0], sizes = [1, 128], strides = [1, 1]} : vector<9x128xf32> to vector<1x128xf32>
    %34 = vector.shape_cast %33 : vector<1x128xf32> to vector<128xf32>
    %35 = vector.shape_cast %34 : vector<128xf32> to vector<1x1x128xf32>
    %36 = vector.broadcast %35 : vector<1x1x128xf32> to vector<16x16x128xf32>
    %37 = arith.mulf %32, %36 : vector<16x16x128xf32>
    %38 = arith.addf %30, %37 : vector<16x16x128xf32>
    %39 = vector.extract_strided_slice %31 {offsets = [1, 0, 0], sizes = [16, 16, 128], strides = [1, 1, 1]} : vector<18x16x128xf32> to vector<16x16x128xf32>
    %40 = vector.extract_strided_slice %7 {offsets = [4, 0], sizes = [1, 128], strides = [1, 1]} : vector<9x128xf32> to vector<1x128xf32>
    %41 = vector.shape_cast %40 : vector<1x128xf32> to vector<128xf32>
    %42 = vector.shape_cast %41 : vector<128xf32> to vector<1x1x128xf32>
    %43 = vector.broadcast %42 : vector<1x1x128xf32> to vector<16x16x128xf32>
    %44 = arith.mulf %39, %43 : vector<16x16x128xf32>
    %45 = arith.addf %38, %44 : vector<16x16x128xf32>
    %46 = vector.extract_strided_slice %31 {offsets = [2, 0, 0], sizes = [16, 16, 128], strides = [1, 1, 1]} : vector<18x16x128xf32> to vector<16x16x128xf32>
    %47 = vector.extract_strided_slice %7 {offsets = [7, 0], sizes = [1, 128], strides = [1, 1]} : vector<9x128xf32> to vector<1x128xf32>
    %48 = vector.shape_cast %47 : vector<1x128xf32> to vector<128xf32>
    %49 = vector.shape_cast %48 : vector<128xf32> to vector<1x1x128xf32>
    %50 = vector.broadcast %49 : vector<1x1x128xf32> to vector<16x16x128xf32>
    %51 = arith.mulf %46, %50 : vector<16x16x128xf32>
    %52 = arith.addf %45, %51 : vector<16x16x128xf32>
    %53 = vector.extract_strided_slice %6 {offsets = [0, 2, 0], sizes = [18, 16, 128], strides = [1, 1, 1]} : vector<18x18x128xf32> to vector<18x16x128xf32>
    %54 = vector.extract_strided_slice %53 {offsets = [0, 0, 0], sizes = [16, 16, 128], strides = [1, 1, 1]} : vector<18x16x128xf32> to vector<16x16x128xf32>
    %55 = vector.extract_strided_slice %7 {offsets = [2, 0], sizes = [1, 128], strides = [1, 1]} : vector<9x128xf32> to vector<1x128xf32>
    %56 = vector.shape_cast %55 : vector<1x128xf32> to vector<128xf32>
    %57 = vector.shape_cast %56 : vector<128xf32> to vector<1x1x128xf32>
    %58 = vector.broadcast %57 : vector<1x1x128xf32> to vector<16x16x128xf32>
    %59 = arith.mulf %54, %58 : vector<16x16x128xf32>
    %60 = arith.addf %52, %59 : vector<16x16x128xf32>
    %61 = vector.extract_strided_slice %53 {offsets = [1, 0, 0], sizes = [16, 16, 128], strides = [1, 1, 1]} : vector<18x16x128xf32> to vector<16x16x128xf32>
    %62 = vector.extract_strided_slice %7 {offsets = [5, 0], sizes = [1, 128], strides = [1, 1]} : vector<9x128xf32> to vector<1x128xf32>
    %63 = vector.shape_cast %62 : vector<1x128xf32> to vector<128xf32>
    %64 = vector.shape_cast %63 : vector<128xf32> to vector<1x1x128xf32>
    %65 = vector.broadcast %64 : vector<1x1x128xf32> to vector<16x16x128xf32>
    %66 = arith.mulf %61, %65 : vector<16x16x128xf32>
    %67 = arith.addf %60, %66 : vector<16x16x128xf32>
    %68 = vector.extract_strided_slice %53 {offsets = [2, 0, 0], sizes = [16, 16, 128], strides = [1, 1, 1]} : vector<18x16x128xf32> to vector<16x16x128xf32>
    %69 = vector.extract_strided_slice %7 {offsets = [8, 0], sizes = [1, 128], strides = [1, 1]} : vector<9x128xf32> to vector<1x128xf32>
    %70 = vector.shape_cast %69 : vector<1x128xf32> to vector<128xf32>
    %71 = vector.shape_cast %70 : vector<128xf32> to vector<1x1x128xf32>
    %72 = vector.broadcast %71 : vector<1x1x128xf32> to vector<16x16x128xf32>
    %73 = arith.mulf %68, %72 : vector<16x16x128xf32>
    %74 = arith.addf %67, %73 : vector<16x16x128xf32>
    %75 = vector.shape_cast %74 : vector<16x16x128xf32> to vector<256x128xf32>
    %c0_13 = arith.constant 0 : index
    %c0_14 = arith.constant 0 : index
    %76 = vector.load %arg6[%c0_13, %c0_14] : memref<128x128xf32, #tpu.memory_space<vmem>>, vector<128x128xf32>
    %cst_15 = arith.constant dense<0.000000e+00> : vector<256x128xf32>
    %77 = tpu.matmul %75, %76, %cst_15 {dimension_numbers = #tpu.dot_dimension_numbers<[1], [0], [0], [1], [0, 0, 1, 1], [], []>} : vector<256x128xf32>, vector<128x128xf32>, vector<256x128xf32> -> vector<256x128xf32>
    %78 = vector.shape_cast %77 : vector<256x128xf32> to vector<1x16x16x128xf32>
    %c0_16 = arith.constant 0 : index
    %c0_17 = arith.constant 0 : index
    %c0_18 = arith.constant 0 : index
    %c0_19 = arith.constant 0 : index
    %79 = vector.load %arg7[%c0_16, %c0_17, %c0_18, %c0_19] : memref<1x16x16x128xf32, #tpu.memory_space<vmem>>, vector<1x16x16x128xf32>
    tpu.vector_store %arg7[%c0_16, %c0_17, %c0_18, %c0_19], %78 {strides = array<i32>} : memref<1x16x16x128xf32, #tpu.memory_space<vmem>>, vector<1x16x16x128xf32>,
    return
  }
  func.func @transform_0(%arg0: i32, %arg1: i32) -> (i32, i32, i32, i32) {
    %c0_i32 = arith.constant 0 : i32
    %c0_i32_0 = arith.constant 0 : i32
    %c0_i32_1 = arith.constant 0 : i32
    return %arg0, %arg1, %c0_i32, %c0_i32_0 : i32, i32, i32, i32
  }
  func.func @transform_1(%arg0: i32, %arg1: i32) -> (i32, i32, i32, i32) {
    %c1_i32 = arith.constant 1 : i32
    %0 = arith.addi %arg1, %c1_i32 : i32
    %c16_i32 = arith.constant 16 : i32
    %1 = arith.muli %0, %c16_i32 : i32
    %c0_i32 = arith.constant 0 : i32
    %2 = arith.addi %1, %c0_i32 : i32
    %c0_i32_0 = arith.constant 0 : i32
    %c0_i32_1 = arith.constant 0 : i32
    %c0_i32_2 = arith.constant 0 : i32
    return %arg0, %2, %c0_i32_0, %c0_i32_1 : i32, i32, i32, i32
  }
  func.func @transform_2(%arg0: i32, %arg1: i32) -> (i32, i32, i32, i32) {
    %c1_i32 = arith.constant 1 : i32
    %0 = arith.addi %arg1, %c1_i32 : i32
    %c16_i32 = arith.constant 16 : i32
    %1 = arith.muli %0, %c16_i32 : i32
    %c1_i32_0 = arith.constant 1 : i32
    %2 = arith.addi %1, %c1_i32_0 : i32
    %c0_i32 = arith.constant 0 : i32
    %c0_i32_1 = arith.constant 0 : i32
    %c0_i32_2 = arith.constant 0 : i32
    return %arg0, %2, %c0_i32, %c0_i32_1 : i32, i32, i32, i32
  }
  func.func @transform_3(%arg0: i32, %arg1: i32) -> (i32, i32) {
    %c0_i32 = arith.constant 0 : i32
    %c0_i32_0 = arith.constant 0 : i32
    %c0_i32_1 = arith.constant 0 : i32
    return %c0_i32, %c0_i32_0 : i32, i32
  }
  func.func @transform_4(%arg0: i32, %arg1: i32) -> (i32, i32) {
    %c0_i32 = arith.constant 0 : i32
    %c0_i32_0 = arith.constant 0 : i32
    %c0_i32_1 = arith.constant 0 : i32
    return %c0_i32, %c0_i32_0 : i32, i32
  }
  func.func @transform_5(%arg0: i32, %arg1: i32) -> (i32, i32, i32, i32) {
    %c0_i32 = arith.constant 0 : i32
    %c0_i32_0 = arith.constant 0 : i32
    %c0_i32_1 = arith.constant 0 : i32
    return %arg0, %arg1, %c0_i32, %c0_i32_0 : i32, i32, i32, i32
  }
}

</mosaic_0001>

<llo_original>
// kernel: separable_conv.1
$region0: #{separable_conv.1}
  #allocation0 [shape = 'u32[]', space=smem, size = 0x4, offset = 0x4, fixed_abs, tag = 'smem constant byte address 0x4 - core index']
  #allocation1 [shape = 'u32[144,128]{1,0:T(1,128)}', space=vmem, size = 0x12000, scoped, tag = 'internal scratch']
  %s0 = inlined_call_operand.vmem [shape: f32[2,18,18,128], index: 0, kind: input, shape index: {}, may-alias: {0,1,2}]
  %s1 = inlined_call_operand.vmem [shape: f32[2,18,18,128], index: 1, kind: input, shape index: {}, may-alias: {0,1,2}]
  %s2 = inlined_call_operand.vmem [shape: f32[2,18,18,128], index: 2, kind: input, shape index: {}, may-alias: {0,1,2}]
  %s3 = inlined_call_operand.vmem [shape: f32[9,128], index: 3, kind: input, shape index: {}]
  %s4 = inlined_call_operand.vmem [shape: f32[128,128], index: 4, kind: input, shape index: {}]
  %s5 = inlined_call_operand.vmem [shape: f32[2,16,16,128], index: 5, kind: output, shape index: {}]
  %s6 = sld [smem:[#allocation0]]
  $region53: #{separable_conv.1} parent=0
    _
  %s8 = ssub.s32 1, %s6
  %s9 = scalar_select 0, %s8, %s6
  loop: start=0, step=1, limit=4
  $region2: #{separable_conv.1} parent=0 // loop_pre_header
    _
  $region3: #{separable_conv.1} parent=0 // loop_header
    %s11 = sphi 0, %s15
    %p12 = scmp.ge.s32.totalorder %s11, 4
    %s18 = sphi 0, %s30
    %s19 = sphi 0, %s26
    %s20 = sphi 0, %s18
    %s21 = sphi 0, %s19
    %s22 = sphi 0, %s20
    %s23 = sphi 0, %s21
    %s35 = sphi 0, %s37
    %s38 = sphi 0, %s35
    %s39 = sphi 0, %s38
    %s55 = sphi 0, %s39
    %s67 = sphi 0, %s69
    %s70 = sphi 0, %s67
    %s71 = sphi 0, %s70
    %s87 = sphi 0, %s71
    %s101 = sphi 0, %s103
    %s104 = sphi 0, %s101
    %s105 = sphi 0, %s104
    %s121 = sphi 0, %s105
    %s125 = sphi 0, %s125
    %s127 = sphi 0, %s125
    %s128 = sphi 0, %s127
    %s142 = sphi 0, %s128
    %s146 = sphi 0, %s146
    %s148 = sphi 0, %s146
    %s149 = sphi 0, %s148
    %s163 = sphi 0, %s149
    %s171 = sphi 0, %s173
    %s174 = sphi 0, %s171
    %s175 = sphi 0, %s174
    %s191 = sphi 0, %s175
  $region4: #{separable_conv.1} parent=0 // loop_header_branch
    %14 = sbr.rel (%p12) target = $region8
  $region5: #{separable_conv.1} parent=0 // loop_body
    %s16 = ssub.s32 %s11, 1
    %s17 = ssub.s32 %s11, 2
    %s24 = sadd.s32 1, %s19
    %p25 = scmp.ge.s32.totalorder %s24, 1
    %s26 = scalar_select %p25, 0, %s24
    %s27 = sadd.s32 1, %s18
    %s28 = scalar_select %p25, %s27, %s18
    %p29 = scmp.ge.s32.totalorder %s28, 2
    %s30 = scalar_select %p29, 0, %s28
    %s31 = ssub.s32 %s18, %s30
    %s32 = ssub.s32 %s19, %s26
    %s33 = sor.u32 %s31, %s32
    %p34 = scmp.eq.s32.totalorder %s33, 0
    %s36 = sadd.s32 %s35, 1
    %s37 = scalar_select %p34, %s35, %s36
    %p40 = pneg %p34
    %p41 = scmp.eq.s32.totalorder %s11, 1
    %p42 = por %p40, %p41
    %p43 = scmp.ne.s32.totalorder %s35, %s38
    %p44 = scmp.eq.s32.totalorder %s11, 0
    %p45 = por %p43, %p44
    %p46 = scmp.ne.s32.totalorder %s35, %s38
    %p47 = scmp.eq.s32.totalorder %s16, 1
    %p48 = por %p46, %p47
    %p49 = scmp.ne.s32.totalorder %s38, %s39
    %p50 = scmp.eq.s32.totalorder %s16, 0
    %p51 = por %p49, %p50
    %p52 = scmp.ne.s32.totalorder %s38, %s39
    %p53 = scmp.eq.s32.totalorder %s17, 1
    %p54 = por %p52, %p53
    %p56 = scmp.ne.s32.totalorder %s39, %s55
    %p57 = scmp.eq.s32.totalorder %s17, 0
    %p58 = por %p56, %p57
    %s59 = sadd.s32 %s19, 1
    %s60 = smul.u32 %s59, 16
    %s61 = sadd.s32 %s26, 1
    %s62 = smul.u32 %s61, 16
    %s63 = ssub.s32 %s18, %s30
    %s64 = ssub.s32 %s60, %s62
    %s65 = sor.u32 %s63, %s64
    %p66 = scmp.eq.s32.totalorder %s65, 0
    %s68 = sadd.s32 %s67, 1
    %s69 = scalar_select %p66, %s67, %s68
    %p72 = pneg %p66
    %p73 = scmp.eq.s32.totalorder %s11, 1
    %p74 = por %p72, %p73
    %p75 = scmp.ne.s32.totalorder %s67, %s70
    %p76 = scmp.eq.s32.totalorder %s11, 0
    %p77 = por %p75, %p76
    %p78 = scmp.ne.s32.totalorder %s67, %s70
    %p79 = scmp.eq.s32.totalorder %s16, 1
    %p80 = por %p78, %p79
    %p81 = scmp.ne.s32.totalorder %s70, %s71
    %p82 = scmp.eq.s32.totalorder %s16, 0
    %p83 = por %p81, %p82
    %p84 = scmp.ne.s32.totalorder %s70, %s71
    %p85 = scmp.eq.s32.totalorder %s17, 1
    %p86 = por %p84, %p85
    %p88 = scmp.ne.s32.totalorder %s71, %s87
    %p89 = scmp.eq.s32.totalorder %s17, 0
    %p90 = por %p88, %p89
    %s91 = sadd.s32 %s19, 1
    %s92 = smul.u32 %s91, 16
    %s93 = sadd.s32 %s92, 1
    %s94 = sadd.s32 %s26, 1
    %s95 = smul.u32 %s94, 16
    %s96 = sadd.s32 %s95, 1
    %s97 = ssub.s32 %s18, %s30
    %s98 = ssub.s32 %s93, %s96
    %s99 = sor.u32 %s97, %s98
    %p100 = scmp.eq.s32.totalorder %s99, 0
    %s102 = sadd.s32 %s101, 1
    %s103 = scalar_select %p100, %s101, %s102
    %p106 = pneg %p100
    %p107 = scmp.eq.s32.totalorder %s11, 1
    %p108 = por %p106, %p107
    %p109 = scmp.ne.s32.totalorder %s101, %s104
    %p110 = scmp.eq.s32.totalorder %s11, 0
    %p111 = por %p109, %p110
    %p112 = scmp.ne.s32.totalorder %s101, %s104
    %p113 = scmp.eq.s32.totalorder %s16, 1
    %p114 = por %p112, %p113
    %p115 = scmp.ne.s32.totalorder %s104, %s105
    %p116 = scmp.eq.s32.totalorder %s16, 0
    %p117 = por %p115, %p116
    %p118 = scmp.ne.s32.totalorder %s104, %s105
    %p119 = scmp.eq.s32.totalorder %s17, 1
    %p120 = por %p118, %p119
    %p122 = scmp.ne.s32.totalorder %s105, %s121
    %p123 = scmp.eq.s32.totalorder %s17, 0
    %p124 = por %p122, %p123
    %s126 = sadd.s32 %s125, 1
    %p129 = scmp.eq.s32.totalorder %s11, 1
    %p130 = scmp.ne.s32.totalorder %s125, %s127
    %p131 = scmp.eq.s32.totalorder %s11, 0
    %p132 = por %p130, %p131
    %p133 = scmp.ne.s32.totalorder %s125, %s127
    %p134 = scmp.eq.s32.totalorder %s16, 1
    %p135 = por %p133, %p134
    %p136 = scmp.ne.s32.totalorder %s127, %s128
    %p137 = scmp.eq.s32.totalorder %s16, 0
    %p138 = por %p136, %p137
    %p139 = scmp.ne.s32.totalorder %s127, %s128
    %p140 = scmp.eq.s32.totalorder %s17, 1
    %p141 = por %p139, %p140
    %p143 = scmp.ne.s32.totalorder %s128, %s142
    %p144 = scmp.eq.s32.totalorder %s17, 0
    %p145 = por %p143, %p144
    %s147 = sadd.s32 %s146, 1
    %p150 = scmp.eq.s32.totalorder %s11, 1
    %p151 = scmp.ne.s32.totalorder %s146, %s148
    %p152 = scmp.eq.s32.totalorder %s11, 0
    %p153 = por %p151, %p152
    %p154 = scmp.ne.s32.totalorder %s146, %s148
    %p155 = scmp.eq.s32.totalorder %s16, 1
    %p156 = por %p154, %p155
    %p157 = scmp.ne.s32.totalorder %s148, %s149
    %p158 = scmp.eq.s32.totalorder %s16, 0
    %p159 = por %p157, %p158
    %p160 = scmp.ne.s32.totalorder %s148, %s149
    %p161 = scmp.eq.s32.totalorder %s17, 1
    %p162 = por %p160, %p161
    %p164 = scmp.ne.s32.totalorder %s149, %s163
    %p165 = scmp.eq.s32.totalorder %s17, 0
    %p166 = por %p164, %p165
    %s167 = ssub.s32 %s18, %s30
    %s168 = ssub.s32 %s19, %s26
    %s169 = sor.u32 %s167, %s168
    %p170 = scmp.eq.s32.totalorder %s169, 0
    %s172 = sadd.s32 %s171, 1
    %s173 = scalar_select %p170, %s171, %s172
    %p176 = pneg %p170
    %p177 = scmp.eq.s32.totalorder %s11, 1
    %p178 = por %p176, %p177
    %p179 = scmp.ne.s32.totalorder %s171, %s174
    %p180 = scmp.eq.s32.totalorder %s11, 0
    %p181 = por %p179, %p180
    %p182 = scmp.ne.s32.totalorder %s171, %s174
    %p183 = scmp.eq.s32.totalorder %s16, 1
    %p184 = por %p182, %p183
    %p185 = scmp.ne.s32.totalorder %s174, %s175
    %p186 = scmp.eq.s32.totalorder %s16, 0
    %p187 = por %p185, %p186
    %p188 = scmp.ne.s32.totalorder %s174, %s175
    %p189 = scmp.eq.s32.totalorder %s17, 1
    %p190 = por %p188, %p189
    %p192 = scmp.ne.s32.totalorder %s175, %s191
    %p193 = scmp.eq.s32.totalorder %s17, 0
    %p194 = por %p192, %p193
    %p195 = scmp.le.s32.totalorder 1, %s11
    %p196 = scmp.lt.s32.totalorder %s11, 3
    %p197 = pnand %p195, %p196
    %p198 = pneg %p197
    // Predicated region
    $region9: #{separable_conv.1} parent=5 // pred_check
      _
    $region10: #{separable_conv.1} parent=5 // pred_check_branch
      %200 = sbr.rel (%p197) target = $region12
    $region11: #{separable_conv.1} parent=5 // pred_region
      %s201 = ssub.s32 %s11, 1
      // Predicated region
      $region13: #{separable_conv.1} parent=11 // pred_check
        %p202 = pneg %p138
      $region14: #{separable_conv.1} parent=11 // pred_check_branch
        %204 = sbr.rel (%p202) target = $region16
      $region15: #{separable_conv.1} parent=11 // pred_region
        _
      $region16: #{separable_conv.1} parent=11 // pred_fallthru
        _
      // Predicated region
      $region17: #{separable_conv.1} parent=11 // pred_check
        %p205 = pneg %p159
      $region18: #{separable_conv.1} parent=11 // pred_check_branch
        %207 = sbr.rel (%p205) target = $region20
      $region19: #{separable_conv.1} parent=11 // pred_region
        _
      $region20: #{separable_conv.1} parent=11 // pred_fallthru
        _
    $region12: #{separable_conv.1} parent=5 // pred_fallthru
      _
    %p208 = scmp.lt.s32.totalorder %s11, 2
    // Predicated region
    $region21: #{separable_conv.1} parent=5 // pred_check
      %p209 = pneg %p208
    $region22: #{separable_conv.1} parent=5 // pred_check_branch
      %211 = sbr.rel (%p209) target = $region24
    $region23: #{separable_conv.1} parent=5 // pred_region
      // Predicated region
      $region25: #{separable_conv.1} parent=23 // pred_check
        %p212 = pneg %p45
      $region26: #{separable_conv.1} parent=23 // pred_check_branch
        %214 = sbr.rel (%p212) target = $region28
      $region27: #{separable_conv.1} parent=23 // pred_region
        %s215 = smul.u32 16, %s19
        %s216 = ssub.s32 18, %s215
        %p217 = scmp.lt.s32.totalorder %s216, 16
        %s218 = scalar_select %p217, %s216, 16
        %s219 = smul.u32 128, %s218
        %s220 = smul.u32 %s219, 3
        %p221 = scmp.lt.s32.totalorder %s18, 1
        %s222 = scalar_select %p221, %s18, 1
        %p223 = scmp.lt.s32.totalorder %s215, 17
        %s224 = scalar_select %p223, %s215, 17
        %s225 = smul.addr %s224, 3
        %s226 = smul.addr %s222, 54
        %s227 = sadd.s32 %s225, %s226
        %s228 = smul.addr %s227, 8
        %s229 = scalar_lea.vmem %s0, %s228
        %s230 = smul.u32 16, %s19
        %s231 = ssub.s32 18, %s230
        %p232 = scmp.lt.s32.totalorder %s231, 16
        %s233 = scalar_select %p232, %s231, 16
        %s234 = smul.u32 128, %s233
        %s235 = smul.u32 %s234, 3
      $region28: #{separable_conv.1} parent=23 // pred_fallthru
        _
      // Predicated region
      $region29: #{separable_conv.1} parent=23 // pred_check
        %p236 = pneg %p77
      $region30: #{separable_conv.1} parent=23 // pred_check_branch
        %238 = sbr.rel (%p236) target = $region32
      $region31: #{separable_conv.1} parent=23 // pred_region
        %s239 = sadd.s32 %s19, 1
        %s240 = smul.u32 %s239, 16
        %p241 = scmp.lt.s32.totalorder %s18, 1
        %s242 = scalar_select %p241, %s18, 1
        %p243 = scmp.lt.s32.totalorder %s240, 17
        %s244 = scalar_select %p243, %s240, 17
        %s245 = smul.addr %s244, 3
        %s246 = smul.addr %s242, 54
        %s247 = sadd.s32 %s245, %s246
        %s248 = smul.addr %s247, 8
        %s249 = scalar_lea.vmem %s1, %s248
        %s250 = sadd.s32 %s19, 1
        %s251 = smul.u32 %s250, 16
      $region32: #{separable_conv.1} parent=23 // pred_fallthru
        _
      // Predicated region
      $region33: #{separable_conv.1} parent=23 // pred_check
        %p252 = pneg %p111
      $region34: #{separable_conv.1} parent=23 // pred_check_branch
        %254 = sbr.rel (%p252) target = $region36
      $region35: #{separable_conv.1} parent=23 // pred_region
        %s255 = sadd.s32 %s19, 1
        %s256 = smul.u32 %s255, 16
        %s257 = sadd.s32 %s256, 1
        %p258 = scmp.lt.s32.totalorder %s18, 1
        %s259 = scalar_select %p258, %s18, 1
        %p260 = scmp.lt.s32.totalorder %s257, 17
        %s261 = scalar_select %p260, %s257, 17
        %s262 = smul.addr %s261, 3
        %s263 = smul.addr %s259, 54
        %s264 = sadd.s32 %s262, %s263
        %s265 = smul.addr %s264, 8
        %s266 = scalar_lea.vmem %s2, %s265
        %s267 = sadd.s32 %s19, 1
        %s268 = smul.u32 %s267, 16
        %s269 = sadd.s32 %s268, 1
      $region36: #{separable_conv.1} parent=23 // pred_fallthru
        _
    $region24: #{separable_conv.1} parent=5 // pred_fallthru
      _
    %p270 = scmp.le.s32.totalorder 1, %s11
    %p271 = scmp.lt.s32.totalorder %s11, 3
    %p272 = pnand %p270, %p271
    %p273 = pneg %p272
    // Predicated region
    $region37: #{separable_conv.1} parent=5 // pred_check
      _
    $region38: #{separable_conv.1} parent=5 // pred_check_branch
      %275 = sbr.rel (%p272) target = $region40
    $region39: #{separable_conv.1} parent=5 // pred_region
      %s276 = ssub.s32 %s11, 1
      %s277 = smul.u32 16, %s21
      %s278 = ssub.s32 18, %s277
      %p279 = scmp.lt.s32.totalorder %s278, 16
      %s280 = scalar_select %p279, %s278, 16
      %s281 = smul.u32 128, %s280
      %s282 = smul.u32 %s281, 3
      %p283 = scmp.lt.s32.totalorder %s20, 1
      %s284 = scalar_select %p283, %s20, 1
      %p285 = scmp.lt.s32.totalorder %s277, 17
      %s286 = scalar_select %p285, %s277, 17
      %s287 = smul.addr %s286, 3
      %s288 = smul.addr %s284, 54
      %s289 = sadd.s32 %s287, %s288
      %s290 = smul.addr %s289, 8
      %s291 = scalar_lea.vmem %s0, %s290
      %p292 = pneg %p51
      %p293 = pneg %p48
      %s294 = sadd.s32 %s21, 1
      %s295 = smul.u32 %s294, 16
      %p296 = scmp.lt.s32.totalorder %s20, 1
      %s297 = scalar_select %p296, %s20, 1
      %p298 = scmp.lt.s32.totalorder %s295, 17
      %s299 = scalar_select %p298, %s295, 17
      %s300 = smul.addr %s299, 3
      %s301 = smul.addr %s297, 54
      %s302 = sadd.s32 %s300, %s301
      %s303 = smul.addr %s302, 8
      %s304 = scalar_lea.vmem %s1, %s303
      %p305 = pneg %p83
      %p306 = pneg %p80
      %s307 = sadd.s32 %s21, 1
      %s308 = smul.u32 %s307, 16
      %s309 = sadd.s32 %s308, 1
      %p310 = scmp.lt.s32.totalorder %s20, 1
      %s311 = scalar_select %p310, %s20, 1
      %p312 = scmp.lt.s32.totalorder %s309, 17
      %s313 = scalar_select %p312, %s309, 17
      %s314 = smul.addr %s313, 3
      %s315 = smul.addr %s311, 54
      %s316 = sadd.s32 %s314, %s315
      %s317 = smul.addr %s316, 8
      %s318 = scalar_lea.vmem %s2, %s317
      %p319 = pneg %p117
      %p320 = pneg %p114
      %p321 = pneg %p138
      %p322 = pneg %p135
      %p323 = pneg %p159
      %p324 = pneg %p156
      %p325 = pneg %p187
      %p326 = pneg %p184
      %s327 = smul.u32 16, %s21
      %p328 = scmp.lt.s32.totalorder %s20, 1
      %s329 = scalar_select %p328, %s20, 1
      %p330 = scmp.lt.s32.totalorder %s327, 15
      %s331 = scalar_select %p330, %s327, 15
      %s332 = smul.addr %s331, 2
      %s333 = smul.addr %s329, 32
      %s334 = sadd.s32 %s332, %s333
      %s335 = smul.addr %s334, 8
      %s336 = scalar_lea.vmem %s5, %s335
      %s337 = smul.u32 16, %s21
      %s338 = ssub.s32 18, %s337
      %p339 = scmp.lt.s32.totalorder %s338, 16
      %s340 = scalar_select %p339, %s338, 16
      %s341 = smul.u32 128, %s340
      %s342 = smul.u32 %s341, 3
      %p343 = scmp.lt.s32.totalorder %s20, 1
      %s344 = scalar_select %p343, %s20, 1
      %p345 = scmp.lt.s32.totalorder %s337, 17
      %s346 = scalar_select %p345, %s337, 17
      %s347 = smul.addr %s346, 3
      %s348 = smul.addr %s344, 54
      %s349 = sadd.s32 %s347, %s348
      %s350 = smul.addr %s349, 8
      %s351 = scalar_lea.vmem %s0, %s350
      %s352 = smul.u32 16, %s21
      %s353 = ssub.s32 18, %s352
      %p354 = scmp.lt.s32.totalorder %s353, 16
      %s355 = scalar_select %p354, %s353, 16
      %s356 = smul.u32 128, %s355
      %s357 = smul.u32 %s356, 3
      %s358 = sadd.s32 %s21, 1
      %s359 = smul.u32 %s358, 16
      %p360 = scmp.lt.s32.totalorder %s20, 1
      %s361 = scalar_select %p360, %s20, 1
      %p362 = scmp.lt.s32.totalorder %s359, 17
      %s363 = scalar_select %p362, %s359, 17
      %s364 = smul.addr %s363, 3
      %s365 = smul.addr %s361, 54
      %s366 = sadd.s32 %s364, %s365
      %s367 = smul.addr %s366, 8
      %s368 = scalar_lea.vmem %s1, %s367
      %s369 = sadd.s32 %s21, 1
      %s370 = smul.u32 %s369, 16
      %s371 = sadd.s32 %s21, 1
      %s372 = smul.u32 %s371, 16
      %s373 = sadd.s32 %s372, 1
      %p374 = scmp.lt.s32.totalorder %s20, 1
      %s375 = scalar_select %p374, %s20, 1
      %p376 = scmp.lt.s32.totalorder %s373, 17
      %s377 = scalar_select %p376, %s373, 17
      %s378 = smul.addr %s377, 3
      %s379 = smul.addr %s375, 54
      %s380 = sadd.s32 %s378, %s379
      %s381 = smul.addr %s380, 8
      %s382 = scalar_lea.vmem %s2, %s381
      %s383 = sadd.s32 %s21, 1
      %s384 = smul.u32 %s383, 16
      %s385 = sadd.s32 %s384, 1
      %s386 = smul.u32 16, %s21
      %p387 = scmp.lt.s32.totalorder %s20, 1
      %s388 = scalar_select %p387, %s20, 1
      %p389 = scmp.lt.s32.totalorder %s386, 15
      %s390 = scalar_select %p389, %s386, 15
      %s391 = smul.addr %s390, 2
      %s392 = smul.addr %s388, 32
      %s393 = sadd.s32 %s391, %s392
      %s394 = smul.addr %s393, 8
      %s395 = scalar_lea.vmem %s5, %s394
      %s396 = smul.u32 16, %s21
      %v397 = vld [vmem:[%s351] sm:$0xff]
      %v398 = vld [vmem:[%s351 + $0x8] sm:$0xff]
      %v399 = vld [vmem:[%s351 + $0x10] sm:$0x3]
      %v400 = vld [vmem:[%s351 + $0x18] sm:$0xff]
      %v401 = vld [vmem:[%s351 + $0x20] sm:$0xff]
      %v402 = vld [vmem:[%s351 + $0x28] sm:$0x3]
      %v403 = vld [vmem:[%s351 + $0x30] sm:$0xff]
      %v404 = vld [vmem:[%s351 + $0x38] sm:$0xff]
      %v405 = vld [vmem:[%s351 + $0x40] sm:$0x3]
      %v406 = vld [vmem:[%s351 + $0x48] sm:$0xff]
      %v407 = vld [vmem:[%s351 + $0x50] sm:$0xff]
      %v408 = vld [vmem:[%s351 + $0x58] sm:$0x3]
      %v409 = vld [vmem:[%s351 + $0x60] sm:$0xff]
      %v410 = vld [vmem:[%s351 + $0x68] sm:$0xff]
      %v411 = vld [vmem:[%s351 + $0x70] sm:$0x3]
      %v412 = vld [vmem:[%s351 + $0x78] sm:$0xff]
      %v413 = vld [vmem:[%s351 + $0x80] sm:$0xff]
      %v414 = vld [vmem:[%s351 + $0x88] sm:$0x3]
      %v415 = vld [vmem:[%s351 + $0x90] sm:$0xff]
      %v416 = vld [vmem:[%s351 + $0x98] sm:$0xff]
      %v417 = vld [vmem:[%s351 + $0xa0] sm:$0x3]
      %v418 = vld [vmem:[%s351 + $0xa8] sm:$0xff]
      %v419 = vld [vmem:[%s351 + $0xb0] sm:$0xff]
      %v420 = vld [vmem:[%s351 + $0xb8] sm:$0x3]
      %v421 = vld [vmem:[%s351 + $0xc0] sm:$0xff]
      %v422 = vld [vmem:[%s351 + $0xc8] sm:$0xff]
      %v423 = vld [vmem:[%s351 + $0xd0] sm:$0x3]
      %v424 = vld [vmem:[%s351 + $0xd8] sm:$0xff]
      %v425 = vld [vmem:[%s351 + $0xe0] sm:$0xff]
      %v426 = vld [vmem:[%s351 + $0xe8] sm:$0x3]
      %v427 = vld [vmem:[%s351 + $0xf0] sm:$0xff]
      %v428 = vld [vmem:[%s351 + $0xf8] sm:$0xff]
      %v429 = vld [vmem:[%s351 + $0x100] sm:$0x3]
      %v430 = vld [vmem:[%s351 + $0x108] sm:$0xff]
      %v431 = vld [vmem:[%s351 + $0x110] sm:$0xff]
      %v432 = vld [vmem:[%s351 + $0x118] sm:$0x3]
      %v433 = vld [vmem:[%s351 + $0x120] sm:$0xff]
      %v434 = vld [vmem:[%s351 + $0x128] sm:$0xff]
      %v435 = vld [vmem:[%s351 + $0x130] sm:$0x3]
      %v436 = vld [vmem:[%s351 + $0x138] sm:$0xff]
      %v437 = vld [vmem:[%s351 + $0x140] sm:$0xff]
      %v438 = vld [vmem:[%s351 + $0x148] sm:$0x3]
      %v439 = vld [vmem:[%s351 + $0x150] sm:$0xff]
      %v440 = vld [vmem:[%s351 + $0x158] sm:$0xff]
      %v441 = vld [vmem:[%s351 + $0x160] sm:$0x3]
      %v442 = vld [vmem:[%s351 + $0x168] sm:$0xff]
      %v443 = vld [vmem:[%s351 + $0x170] sm:$0xff]
      %v444 = vld [vmem:[%s351 + $0x178] sm:$0x3]
      %v445 = vld [vmem:[%s368] sm:$0xff]
      %v446 = vld [vmem:[%s368 + $0x8] sm:$0xff]
      %v447 = vld [vmem:[%s368 + $0x10] sm:$0x3]
      %v448 = vld [vmem:[%s382] sm:$0xff]
      %v449 = vld [vmem:[%s382 + $0x8] sm:$0xff]
      %v450 = vld [vmem:[%s382 + $0x10] sm:$0x3]
      %v451 = vld [vmem:[%s3] sm:$0xff]
      %v452 = vld [vmem:[%s3 + $0x8] sm:$0x1]
      %v453 = vlaneseq
      %v454 = vshrl.u32 %v453, 7
      %v455 = vsub.s32 0, %v454
      %v456 = vrot.slane %v451, %v455
      %v457 = vmul.f32 %v397, %v456
      %v458 = vmul.f32 %v398, %v456
      %v459 = vmul.f32 %v400, %v456
      %v460 = vmul.f32 %v401, %v456
      %v461 = vmul.f32 %v403, %v456
      %v462 = vmul.f32 %v404, %v456
      %v463 = vmul.f32 %v406, %v456
      %v464 = vmul.f32 %v407, %v456
      %v465 = vmul.f32 %v409, %v456
      %v466 = vmul.f32 %v410, %v456
      %v467 = vmul.f32 %v412, %v456
      %v468 = vmul.f32 %v413, %v456
      %v469 = vmul.f32 %v415, %v456
      %v470 = vmul.f32 %v416, %v456
      %v471 = vmul.f32 %v418, %v456
      %v472 = vmul.f32 %v419, %v456
      %v473 = vmul.f32 %v421, %v456
      %v474 = vmul.f32 %v422, %v456
      %v475 = vmul.f32 %v424, %v456
      %v476 = vmul.f32 %v425, %v456
      %v477 = vmul.f32 %v427, %v456
      %v478 = vmul.f32 %v428, %v456
      %v479 = vmul.f32 %v430, %v456
      %v480 = vmul.f32 %v431, %v456
      %v481 = vmul.f32 %v433, %v456
      %v482 = vmul.f32 %v434, %v456
      %v483 = vmul.f32 %v436, %v456
      %v484 = vmul.f32 %v437, %v456
      %v485 = vmul.f32 %v439, %v456
      %v486 = vmul.f32 %v440, %v456
      %v487 = vmul.f32 %v442, %v456
      %v488 = vmul.f32 %v443, %v456
      %v489 = vadd.f32 %v457, 0.0
      %v490 = vadd.f32 %v458, 0.0
      %v491 = vadd.f32 %v459, 0.0
      %v492 = vadd.f32 %v460, 0.0
      %v493 = vadd.f32 %v461, 0.0
      %v494 = vadd.f32 %v462, 0.0
      %v495 = vadd.f32 %v463, 0.0
      %v496 = vadd.f32 %v464, 0.0
      %v497 = vadd.f32 %v465, 0.0
      %v498 = vadd.f32 %v466, 0.0
      %v499 = vadd.f32 %v467, 0.0
      %v500 = vadd.f32 %v468, 0.0
      %v501 = vadd.f32 %v469, 0.0
      %v502 = vadd.f32 %v470, 0.0
      %v503 = vadd.f32 %v471, 0.0
      %v504 = vadd.f32 %v472, 0.0
      %v505 = vadd.f32 %v473, 0.0
      %v506 = vadd.f32 %v474, 0.0
      %v507 = vadd.f32 %v475, 0.0
      %v508 = vadd.f32 %v476, 0.0
      %v509 = vadd.f32 %v477, 0.0
      %v510 = vadd.f32 %v478, 0.0
      %v511 = vadd.f32 %v479, 0.0
      %v512 = vadd.f32 %v480, 0.0
      %v513 = vadd.f32 %v481, 0.0
      %v514 = vadd.f32 %v482, 0.0
      %v515 = vadd.f32 %v483, 0.0
      %v516 = vadd.f32 %v484, 0.0
      %v517 = vadd.f32 %v485, 0.0
      %v518 = vadd.f32 %v486, 0.0
      %v519 = vadd.f32 %v487, 0.0
      %v520 = vadd.f32 %v488, 0.0
      %v521 = vlaneseq
      %v522 = vshrl.u32 %v521, 7
      %v523 = vsub.s32 3, %v522
      %v524 = vrot.slane %v451, %v523
      %v525 = vmul.f32 %v400, %v524
      %v526 = vmul.f32 %v401, %v524
      %v527 = vmul.f32 %v403, %v524
      %v528 = vmul.f32 %v404, %v524
      %v529 = vmul.f32 %v406, %v524
      %v530 = vmul.f32 %v407, %v524
      %v531 = vmul.f32 %v409, %v524
      %v532 = vmul.f32 %v410, %v524
      %v533 = vmul.f32 %v412, %v524
      %v534 = vmul.f32 %v413, %v524
      %v535 = vmul.f32 %v415, %v524
      %v536 = vmul.f32 %v416, %v524
      %v537 = vmul.f32 %v418, %v524
      %v538 = vmul.f32 %v419, %v524
      %v539 = vmul.f32 %v421, %v524
      %v540 = vmul.f32 %v422, %v524
      %v541 = vmul.f32 %v424, %v524
      %v542 = vmul.f32 %v425, %v524
      %v543 = vmul.f32 %v427, %v524
      %v544 = vmul.f32 %v428, %v524
      %v545 = vmul.f32 %v430, %v524
      %v546 = vmul.f32 %v431, %v524
      %v547 = vmul.f32 %v433, %v524
      %v548 = vmul.f32 %v434, %v524
      %v549 = vmul.f32 %v436, %v524
      %v550 = vmul.f32 %v437, %v524
      %v551 = vmul.f32 %v439, %v524
      %v552 = vmul.f32 %v440, %v524
      %v553 = vmul.f32 %v442, %v524
      %v554 = vmul.f32 %v443, %v524
      %v555 = vmul.f32 %v445, %v524
      %v556 = vmul.f32 %v446, %v524
      %v557 = vadd.f32 %v489, %v525
      %v558 = vadd.f32 %v490, %v526
      %v559 = vadd.f32 %v491, %v527
      %v560 = vadd.f32 %v492, %v528
      %v561 = vadd.f32 %v493, %v529
      %v562 = vadd.f32 %v494, %v530
      %v563 = vadd.f32 %v495, %v531
      %v564 = vadd.f32 %v496, %v532
      %v565 = vadd.f32 %v497, %v533
      %v566 = vadd.f32 %v498, %v534
      %v567 = vadd.f32 %v499, %v535
      %v568 = vadd.f32 %v500, %v536
      %v569 = vadd.f32 %v501, %v537
      %v570 = vadd.f32 %v502, %v538
      %v571 = vadd.f32 %v503, %v539
      %v572 = vadd.f32 %v504, %v540
      %v573 = vadd.f32 %v505, %v541
      %v574 = vadd.f32 %v506, %v542
      %v575 = vadd.f32 %v507, %v543
      %v576 = vadd.f32 %v508, %v544
      %v577 = vadd.f32 %v509, %v545
      %v578 = vadd.f32 %v510, %v546
      %v579 = vadd.f32 %v511, %v547
      %v580 = vadd.f32 %v512, %v548
      %v581 = vadd.f32 %v513, %v549
      %v582 = vadd.f32 %v514, %v550
      %v583 = vadd.f32 %v515, %v551
      %v584 = vadd.f32 %v516, %v552
      %v585 = vadd.f32 %v517, %v553
      %v586 = vadd.f32 %v518, %v554
      %v587 = vadd.f32 %v519, %v555
      %v588 = vadd.f32 %v520, %v556
      %v589 = vlaneseq
      %v590 = vshrl.u32 %v589, 7
      %v591 = vsub.s32 6, %v590
      %v592 = vrot.slane %v451, %v591
      %v593 = vmul.f32 %v403, %v592
      %v594 = vmul.f32 %v404, %v592
      %v595 = vmul.f32 %v406, %v592
      %v596 = vmul.f32 %v407, %v592
      %v597 = vmul.f32 %v409, %v592
      %v598 = vmul.f32 %v410, %v592
      %v599 = vmul.f32 %v412, %v592
      %v600 = vmul.f32 %v413, %v592
      %v601 = vmul.f32 %v415, %v592
      %v602 = vmul.f32 %v416, %v592
      %v603 = vmul.f32 %v418, %v592
      %v604 = vmul.f32 %v419, %v592
      %v605 = vmul.f32 %v421, %v592
      %v606 = vmul.f32 %v422, %v592
      %v607 = vmul.f32 %v424, %v592
      %v608 = vmul.f32 %v425, %v592
      %v609 = vmul.f32 %v427, %v592
      %v610 = vmul.f32 %v428, %v592
      %v611 = vmul.f32 %v430, %v592
      %v612 = vmul.f32 %v431, %v592
      %v613 = vmul.f32 %v433, %v592
      %v614 = vmul.f32 %v434, %v592
      %v615 = vmul.f32 %v436, %v592
      %v616 = vmul.f32 %v437, %v592
      %v617 = vmul.f32 %v439, %v592
      %v618 = vmul.f32 %v440, %v592
      %v619 = vmul.f32 %v442, %v592
      %v620 = vmul.f32 %v443, %v592
      %v621 = vmul.f32 %v445, %v592
      %v622 = vmul.f32 %v446, %v592
      %v623 = vmul.f32 %v448, %v592
      %v624 = vmul.f32 %v449, %v592
      %v625 = vadd.f32 %v557, %v593
      %v626 = vadd.f32 %v558, %v594
      %v627 = vadd.f32 %v559, %v595
      %v628 = vadd.f32 %v560, %v596
      %v629 = vadd.f32 %v561, %v597
      %v630 = vadd.f32 %v562, %v598
      %v631 = vadd.f32 %v563, %v599
      %v632 = vadd.f32 %v564, %v600
      %v633 = vadd.f32 %v565, %v601
      %v634 = vadd.f32 %v566, %v602
      %v635 = vadd.f32 %v567, %v603
      %v636 = vadd.f32 %v568, %v604
      %v637 = vadd.f32 %v569, %v605
      %v638 = vadd.f32 %v570, %v606
      %v639 = vadd.f32 %v571, %v607
      %v640 = vadd.f32 %v572, %v608
      %v641 = vadd.f32 %v573, %v609
      %v642 = vadd.f32 %v574, %v610
      %v643 = vadd.f32 %v575, %v611
      %v644 = vadd.f32 %v576, %v612
      %v645 = vadd.f32 %v577, %v613
      %v646 = vadd.f32 %v578, %v614
      %v647 = vadd.f32 %v579, %v615
      %v648 = vadd.f32 %v580, %v616
      %v649 = vadd.f32 %v581, %v617
      %v650 = vadd.f32 %v582, %v618
      %v651 = vadd.f32 %v583, %v619
      %v652 = vadd.f32 %v584, %v620
      %v653 = vadd.f32 %v585, %v621
      %v654 = vadd.f32 %v586, %v622
      %v655 = vadd.f32 %v587, %v623
      %v656 = vadd.f32 %v588, %v624
      %v657 = vlaneseq
      %v658 = vshrl.u32 %v657, 7
      %v659 = vsub.s32 1, %v658
      %v660 = vrot.slane %v451, %v659
      %v661 = vmul.f32 %v397, %v660
      %v662 = vmul.f32 %v398, %v660
      %v663 = vmul.f32 %v399, %v660
      %v664 = vmul.f32 %v400, %v660
      %v665 = vmul.f32 %v401, %v660
      %v666 = vmul.f32 %v402, %v660
      %v667 = vmul.f32 %v403, %v660
      %v668 = vmul.f32 %v404, %v660
      %v669 = vmul.f32 %v405, %v660
      %v670 = vmul.f32 %v406, %v660
      %v671 = vmul.f32 %v407, %v660
      %v672 = vmul.f32 %v408, %v660
      %v673 = vmul.f32 %v409, %v660
      %v674 = vmul.f32 %v410, %v660
      %v675 = vmul.f32 %v411, %v660
      %v676 = vmul.f32 %v412, %v660
      %v677 = vmul.f32 %v413, %v660
      %v678 = vmul.f32 %v414, %v660
      %v679 = vmul.f32 %v415, %v660
      %v680 = vmul.f32 %v416, %v660
      %v681 = vmul.f32 %v417, %v660
      %v682 = vmul.f32 %v418, %v660
      %v683 = vmul.f32 %v419, %v660
      %v684 = vmul.f32 %v420, %v660
      %v685 = vmul.f32 %v421, %v660
      %v686 = vmul.f32 %v422, %v660
      %v687 = vmul.f32 %v423, %v660
      %v688 = vmul.f32 %v424, %v660
      %v689 = vmul.f32 %v425, %v660
      %v690 = vmul.f32 %v426, %v660
      %v691 = vmul.f32 %v427, %v660
      %v692 = vmul.f32 %v428, %v660
      %v693 = vmul.f32 %v429, %v660
      %v694 = vmul.f32 %v430, %v660
      %v695 = vmul.f32 %v431, %v660
      %v696 = vmul.f32 %v432, %v660
      %v697 = vmul.f32 %v433, %v660
      %v698 = vmul.f32 %v434, %v660
      %v699 = vmul.f32 %v435, %v660
      %v700 = vmul.f32 %v436, %v660
      %v701 = vmul.f32 %v437, %v660
      %v702 = vmul.f32 %v438, %v660
      %v703 = vmul.f32 %v439, %v660
      %v704 = vmul.f32 %v440, %v660
      %v705 = vmul.f32 %v441, %v660
      %v706 = vmul.f32 %v442, %v660
      %v707 = vmul.f32 %v443, %v660
      %v708 = vmul.f32 %v444, %v660
      %vm757 = vcmask 1046528
      %v758 = vrot.slane %v661, 1
      %v759 = vrot.slane %v662, 1
      %v760 = vsel %vm757, %v758, %v759
      %v761 = vrot.slane %v663, 1
      %v762 = vsel %vm757, %v759, %v761
      %v763 = vrot.slane %v664, 1
      %v764 = vrot.slane %v665, 1
      %v765 = vsel %vm757, %v763, %v764
      %v766 = vrot.slane %v666, 1
      %v767 = vsel %vm757, %v764, %v766
      %v768 = vrot.slane %v667, 1
      %v769 = vrot.slane %v668, 1
      %v770 = vsel %vm757, %v768, %v769
      %v771 = vrot.slane %v669, 1
      %v772 = vsel %vm757, %v769, %v771
      %v773 = vrot.slane %v670, 1
      %v774 = vrot.slane %v671, 1
      %v775 = vsel %vm757, %v773, %v774
      %v776 = vrot.slane %v672, 1
      %v777 = vsel %vm757, %v774, %v776
      %v778 = vrot.slane %v673, 1
      %v779 = vrot.slane %v674, 1
      %v780 = vsel %vm757, %v778, %v779
      %v781 = vrot.slane %v675, 1
      %v782 = vsel %vm757, %v779, %v781
      %v783 = vrot.slane %v676, 1
      %v784 = vrot.slane %v677, 1
      %v785 = vsel %vm757, %v783, %v784
      %v786 = vrot.slane %v678, 1
      %v787 = vsel %vm757, %v784, %v786
      %v788 = vrot.slane %v679, 1
      %v789 = vrot.slane %v680, 1
      %v790 = vsel %vm757, %v788, %v789
      %v791 = vrot.slane %v681, 1
      %v792 = vsel %vm757, %v789, %v791
      %v793 = vrot.slane %v682, 1
      %v794 = vrot.slane %v683, 1
      %v795 = vsel %vm757, %v793, %v794
      %v796 = vrot.slane %v684, 1
      %v797 = vsel %vm757, %v794, %v796
      %v798 = vrot.slane %v685, 1
      %v799 = vrot.slane %v686, 1
      %v800 = vsel %vm757, %v798, %v799
      %v801 = vrot.slane %v687, 1
      %v802 = vsel %vm757, %v799, %v801
      %v803 = vrot.slane %v688, 1
      %v804 = vrot.slane %v689, 1
      %v805 = vsel %vm757, %v803, %v804
      %v806 = vrot.slane %v690, 1
      %v807 = vsel %vm757, %v804, %v806
      %v808 = vrot.slane %v691, 1
      %v809 = vrot.slane %v692, 1
      %v810 = vsel %vm757, %v808, %v809
      %v811 = vrot.slane %v693, 1
      %v812 = vsel %vm757, %v809, %v811
      %v813 = vrot.slane %v694, 1
      %v814 = vrot.slane %v695, 1
      %v815 = vsel %vm757, %v813, %v814
      %v816 = vrot.slane %v696, 1
      %v817 = vsel %vm757, %v814, %v816
      %v818 = vrot.slane %v697, 1
      %v819 = vrot.slane %v698, 1
      %v820 = vsel %vm757, %v818, %v819
      %v821 = vrot.slane %v699, 1
      %v822 = vsel %vm757, %v819, %v821
      %v823 = vrot.slane %v700, 1
      %v824 = vrot.slane %v701, 1
      %v825 = vsel %vm757, %v823, %v824
      %v826 = vrot.slane %v702, 1
      %v827 = vsel %vm757, %v824, %v826
      %v828 = vrot.slane %v703, 1
      %v829 = vrot.slane %v704, 1
      %v830 = vsel %vm757, %v828, %v829
      %v831 = vrot.slane %v705, 1
      %v832 = vsel %vm757, %v829, %v831
      %v833 = vrot.slane %v706, 1
      %v834 = vrot.slane %v707, 1
      %v835 = vsel %vm757, %v833, %v834
      %v836 = vrot.slane %v708, 1
      %v837 = vsel %vm757, %v834, %v836
      %v870 = vadd.f32 %v625, %v760
      %v871 = vadd.f32 %v626, %v762
      %v872 = vadd.f32 %v627, %v765
      %v873 = vadd.f32 %v628, %v767
      %v874 = vadd.f32 %v629, %v770
      %v875 = vadd.f32 %v630, %v772
      %v876 = vadd.f32 %v631, %v775
      %v877 = vadd.f32 %v632, %v777
      %v878 = vadd.f32 %v633, %v780
      %v879 = vadd.f32 %v634, %v782
      %v880 = vadd.f32 %v635, %v785
      %v881 = vadd.f32 %v636, %v787
      %v882 = vadd.f32 %v637, %v790
      %v883 = vadd.f32 %v638, %v792
      %v884 = vadd.f32 %v639, %v795
      %v885 = vadd.f32 %v640, %v797
      %v886 = vadd.f32 %v641, %v800
      %v887 = vadd.f32 %v642, %v802
      %v888 = vadd.f32 %v643, %v805
      %v889 = vadd.f32 %v644, %v807
      %v890 = vadd.f32 %v645, %v810
      %v891 = vadd.f32 %v646, %v812
      %v892 = vadd.f32 %v647, %v815
      %v893 = vadd.f32 %v648, %v817
      %v894 = vadd.f32 %v649, %v820
      %v895 = vadd.f32 %v650, %v822
      %v896 = vadd.f32 %v651, %v825
      %v897 = vadd.f32 %v652, %v827
      %v898 = vadd.f32 %v653, %v830
      %v899 = vadd.f32 %v654, %v832
      %v900 = vadd.f32 %v655, %v835
      %v901 = vadd.f32 %v656, %v837
      %v902 = vlaneseq
      %v903 = vshrl.u32 %v902, 7
      %v904 = vsub.s32 4, %v903
      %v905 = vrot.slane %v451, %v904
      %v906 = vmul.f32 %v400, %v905
      %v907 = vmul.f32 %v401, %v905
      %v908 = vmul.f32 %v402, %v905
      %v909 = vmul.f32 %v403, %v905
      %v910 = vmul.f32 %v404, %v905
      %v911 = vmul.f32 %v405, %v905
      %v912 = vmul.f32 %v406, %v905
      %v913 = vmul.f32 %v407, %v905
      %v914 = vmul.f32 %v408, %v905
      %v915 = vmul.f32 %v409, %v905
      %v916 = vmul.f32 %v410, %v905
      %v917 = vmul.f32 %v411, %v905
      %v918 = vmul.f32 %v412, %v905
      %v919 = vmul.f32 %v413, %v905
      %v920 = vmul.f32 %v414, %v905
      %v921 = vmul.f32 %v415, %v905
      %v922 = vmul.f32 %v416, %v905
      %v923 = vmul.f32 %v417, %v905
      %v924 = vmul.f32 %v418, %v905
      %v925 = vmul.f32 %v419, %v905
      %v926 = vmul.f32 %v420, %v905
      %v927 = vmul.f32 %v421, %v905
      %v928 = vmul.f32 %v422, %v905
      %v929 = vmul.f32 %v423, %v905
      %v930 = vmul.f32 %v424, %v905
      %v931 = vmul.f32 %v425, %v905
      %v932 = vmul.f32 %v426, %v905
      %v933 = vmul.f32 %v427, %v905
      %v934 = vmul.f32 %v428, %v905
      %v935 = vmul.f32 %v429, %v905
      %v936 = vmul.f32 %v430, %v905
      %v937 = vmul.f32 %v431, %v905
      %v938 = vmul.f32 %v432, %v905
      %v939 = vmul.f32 %v433, %v905
      %v940 = vmul.f32 %v434, %v905
      %v941 = vmul.f32 %v435, %v905
      %v942 = vmul.f32 %v436, %v905
      %v943 = vmul.f32 %v437, %v905
      %v944 = vmul.f32 %v438, %v905
      %v945 = vmul.f32 %v439, %v905
      %v946 = vmul.f32 %v440, %v905
      %v947 = vmul.f32 %v441, %v905
      %v948 = vmul.f32 %v442, %v905
      %v949 = vmul.f32 %v443, %v905
      %v950 = vmul.f32 %v444, %v905
      %v951 = vmul.f32 %v445, %v905
      %v952 = vmul.f32 %v446, %v905
      %v953 = vmul.f32 %v447, %v905
      %v1002 = vrot.slane %v906, 1
      %v1003 = vrot.slane %v907, 1
      %v1004 = vsel %vm757, %v1002, %v1003
      %v1005 = vrot.slane %v908, 1
      %v1006 = vsel %vm757, %v1003, %v1005
      %v1007 = vrot.slane %v909, 1
      %v1008 = vrot.slane %v910, 1
      %v1009 = vsel %vm757, %v1007, %v1008
      %v1010 = vrot.slane %v911, 1
      %v1011 = vsel %vm757, %v1008, %v1010
      %v1012 = vrot.slane %v912, 1
      %v1013 = vrot.slane %v913, 1
      %v1014 = vsel %vm757, %v1012, %v1013
      %v1015 = vrot.slane %v914, 1
      %v1016 = vsel %vm757, %v1013, %v1015
      %v1017 = vrot.slane %v915, 1
      %v1018 = vrot.slane %v916, 1
      %v1019 = vsel %vm757, %v1017, %v1018
      %v1020 = vrot.slane %v917, 1
      %v1021 = vsel %vm757, %v1018, %v1020
      %v1022 = vrot.slane %v918, 1
      %v1023 = vrot.slane %v919, 1
      %v1024 = vsel %vm757, %v1022, %v1023
      %v1025 = vrot.slane %v920, 1
      %v1026 = vsel %vm757, %v1023, %v1025
      %v1027 = vrot.slane %v921, 1
      %v1028 = vrot.slane %v922, 1
      %v1029 = vsel %vm757, %v1027, %v1028
      %v1030 = vrot.slane %v923, 1
      %v1031 = vsel %vm757, %v1028, %v1030
      %v1032 = vrot.slane %v924, 1
      %v1033 = vrot.slane %v925, 1
      %v1034 = vsel %vm757, %v1032, %v1033
      %v1035 = vrot.slane %v926, 1
      %v1036 = vsel %vm757, %v1033, %v1035
      %v1037 = vrot.slane %v927, 1
      %v1038 = vrot.slane %v928, 1
      %v1039 = vsel %vm757, %v1037, %v1038
      %v1040 = vrot.slane %v929, 1
      %v1041 = vsel %vm757, %v1038, %v1040
      %v1042 = vrot.slane %v930, 1
      %v1043 = vrot.slane %v931, 1
      %v1044 = vsel %vm757, %v1042, %v1043
      %v1045 = vrot.slane %v932, 1
      %v1046 = vsel %vm757, %v1043, %v1045
      %v1047 = vrot.slane %v933, 1
      %v1048 = vrot.slane %v934, 1
      %v1049 = vsel %vm757, %v1047, %v1048
      %v1050 = vrot.slane %v935, 1
      %v1051 = vsel %vm757, %v1048, %v1050
      %v1052 = vrot.slane %v936, 1
      %v1053 = vrot.slane %v937, 1
      %v1054 = vsel %vm757, %v1052, %v1053
      %v1055 = vrot.slane %v938, 1
      %v1056 = vsel %vm757, %v1053, %v1055
      %v1057 = vrot.slane %v939, 1
      %v1058 = vrot.slane %v940, 1
      %v1059 = vsel %vm757, %v1057, %v1058
      %v1060 = vrot.slane %v941, 1
      %v1061 = vsel %vm757, %v1058, %v1060
      %v1062 = vrot.slane %v942, 1
      %v1063 = vrot.slane %v943, 1
      %v1064 = vsel %vm757, %v1062, %v1063
      %v1065 = vrot.slane %v944, 1
      %v1066 = vsel %vm757, %v1063, %v1065
      %v1067 = vrot.slane %v945, 1
      %v1068 = vrot.slane %v946, 1
      %v1069 = vsel %vm757, %v1067, %v1068
      %v1070 = vrot.slane %v947, 1
      %v1071 = vsel %vm757, %v1068, %v1070
      %v1072 = vrot.slane %v948, 1
      %v1073 = vrot.slane %v949, 1
      %v1074 = vsel %vm757, %v1072, %v1073
      %v1075 = vrot.slane %v950, 1
      %v1076 = vsel %vm757, %v1073, %v1075
      %v1077 = vrot.slane %v951, 1
      %v1078 = vrot.slane %v952, 1
      %v1079 = vsel %vm757, %v1077, %v1078
      %v1080 = vrot.slane %v953, 1
      %v1081 = vsel %vm757, %v1078, %v1080
      %v1114 = vadd.f32 %v870, %v1004
      %v1115 = vadd.f32 %v871, %v1006
      %v1116 = vadd.f32 %v872, %v1009
      %v1117 = vadd.f32 %v873, %v1011
      %v1118 = vadd.f32 %v874, %v1014
      %v1119 = vadd.f32 %v875, %v1016
      %v1120 = vadd.f32 %v876, %v1019
      %v1121 = vadd.f32 %v877, %v1021
      %v1122 = vadd.f32 %v878, %v1024
      %v1123 = vadd.f32 %v879, %v1026
      %v1124 = vadd.f32 %v880, %v1029
      %v1125 = vadd.f32 %v881, %v1031
      %v1126 = vadd.f32 %v882, %v1034
      %v1127 = vadd.f32 %v883, %v1036
      %v1128 = vadd.f32 %v884, %v1039
      %v1129 = vadd.f32 %v885, %v1041
      %v1130 = vadd.f32 %v886, %v1044
      %v1131 = vadd.f32 %v887, %v1046
      %v1132 = vadd.f32 %v888, %v1049
      %v1133 = vadd.f32 %v889, %v1051
      %v1134 = vadd.f32 %v890, %v1054
      %v1135 = vadd.f32 %v891, %v1056
      %v1136 = vadd.f32 %v892, %v1059
      %v1137 = vadd.f32 %v893, %v1061
      %v1138 = vadd.f32 %v894, %v1064
      %v1139 = vadd.f32 %v895, %v1066
      %v1140 = vadd.f32 %v896, %v1069
      %v1141 = vadd.f32 %v897, %v1071
      %v1142 = vadd.f32 %v898, %v1074
      %v1143 = vadd.f32 %v899, %v1076
      %v1144 = vadd.f32 %v900, %v1079
      %v1145 = vadd.f32 %v901, %v1081
      %v1146 = vlaneseq
      %v1147 = vshrl.u32 %v1146, 7
      %v1148 = vsub.s32 7, %v1147
      %v1149 = vrot.slane %v451, %v1148
      %v1150 = vmul.f32 %v403, %v1149
      %v1151 = vmul.f32 %v404, %v1149
      %v1152 = vmul.f32 %v405, %v1149
      %v1153 = vmul.f32 %v406, %v1149
      %v1154 = vmul.f32 %v407, %v1149
      %v1155 = vmul.f32 %v408, %v1149
      %v1156 = vmul.f32 %v409, %v1149
      %v1157 = vmul.f32 %v410, %v1149
      %v1158 = vmul.f32 %v411, %v1149
      %v1159 = vmul.f32 %v412, %v1149
      %v1160 = vmul.f32 %v413, %v1149
      %v1161 = vmul.f32 %v414, %v1149
      %v1162 = vmul.f32 %v415, %v1149
      %v1163 = vmul.f32 %v416, %v1149
      %v1164 = vmul.f32 %v417, %v1149
      %v1165 = vmul.f32 %v418, %v1149
      %v1166 = vmul.f32 %v419, %v1149
      %v1167 = vmul.f32 %v420, %v1149
      %v1168 = vmul.f32 %v421, %v1149
      %v1169 = vmul.f32 %v422, %v1149
      %v1170 = vmul.f32 %v423, %v1149
      %v1171 = vmul.f32 %v424, %v1149
      %v1172 = vmul.f32 %v425, %v1149
      %v1173 = vmul.f32 %v426, %v1149
      %v1174 = vmul.f32 %v427, %v1149
      %v1175 = vmul.f32 %v428, %v1149
      %v1176 = vmul.f32 %v429, %v1149
      %v1177 = vmul.f32 %v430, %v1149
      %v1178 = vmul.f32 %v431, %v1149
      %v1179 = vmul.f32 %v432, %v1149
      %v1180 = vmul.f32 %v433, %v1149
      %v1181 = vmul.f32 %v434, %v1149
      %v1182 = vmul.f32 %v435, %v1149
      %v1183 = vmul.f32 %v436, %v1149
      %v1184 = vmul.f32 %v437, %v1149
      %v1185 = vmul.f32 %v438, %v1149
      %v1186 = vmul.f32 %v439, %v1149
      %v1187 = vmul.f32 %v440, %v1149
      %v1188 = vmul.f32 %v441, %v1149
      %v1189 = vmul.f32 %v442, %v1149
      %v1190 = vmul.f32 %v443, %v1149
      %v1191 = vmul.f32 %v444, %v1149
      %v1192 = vmul.f32 %v445, %v1149
      %v1193 = vmul.f32 %v446, %v1149
      %v1194 = vmul.f32 %v447, %v1149
      %v1195 = vmul.f32 %v448, %v1149
      %v1196 = vmul.f32 %v449, %v1149
      %v1197 = vmul.f32 %v450, %v1149
      %v1246 = vrot.slane %v1150, 1
      %v1247 = vrot.slane %v1151, 1
      %v1248 = vsel %vm757, %v1246, %v1247
      %v1249 = vrot.slane %v1152, 1
      %v1250 = vsel %vm757, %v1247, %v1249
      %v1251 = vrot.slane %v1153, 1
      %v1252 = vrot.slane %v1154, 1
      %v1253 = vsel %vm757, %v1251, %v1252
      %v1254 = vrot.slane %v1155, 1
      %v1255 = vsel %vm757, %v1252, %v1254
      %v1256 = vrot.slane %v1156, 1
      %v1257 = vrot.slane %v1157, 1
      %v1258 = vsel %vm757, %v1256, %v1257
      %v1259 = vrot.slane %v1158, 1
      %v1260 = vsel %vm757, %v1257, %v1259
      %v1261 = vrot.slane %v1159, 1
      %v1262 = vrot.slane %v1160, 1
      %v1263 = vsel %vm757, %v1261, %v1262
      %v1264 = vrot.slane %v1161, 1
      %v1265 = vsel %vm757, %v1262, %v1264
      %v1266 = vrot.slane %v1162, 1
      %v1267 = vrot.slane %v1163, 1
      %v1268 = vsel %vm757, %v1266, %v1267
      %v1269 = vrot.slane %v1164, 1
      %v1270 = vsel %vm757, %v1267, %v1269
      %v1271 = vrot.slane %v1165, 1
      %v1272 = vrot.slane %v1166, 1
      %v1273 = vsel %vm757, %v1271, %v1272
      %v1274 = vrot.slane %v1167, 1
      %v1275 = vsel %vm757, %v1272, %v1274
      %v1276 = vrot.slane %v1168, 1
      %v1277 = vrot.slane %v1169, 1
      %v1278 = vsel %vm757, %v1276, %v1277
      %v1279 = vrot.slane %v1170, 1
      %v1280 = vsel %vm757, %v1277, %v1279
      %v1281 = vrot.slane %v1171, 1
      %v1282 = vrot.slane %v1172, 1
      %v1283 = vsel %vm757, %v1281, %v1282
      %v1284 = vrot.slane %v1173, 1
      %v1285 = vsel %vm757, %v1282, %v1284
      %v1286 = vrot.slane %v1174, 1
      %v1287 = vrot.slane %v1175, 1
      %v1288 = vsel %vm757, %v1286, %v1287
      %v1289 = vrot.slane %v1176, 1
      %v1290 = vsel %vm757, %v1287, %v1289
      %v1291 = vrot.slane %v1177, 1
      %v1292 = vrot.slane %v1178, 1
      %v1293 = vsel %vm757, %v1291, %v1292
      %v1294 = vrot.slane %v1179, 1
      %v1295 = vsel %vm757, %v1292, %v1294
      %v1296 = vrot.slane %v1180, 1
      %v1297 = vrot.slane %v1181, 1
      %v1298 = vsel %vm757, %v1296, %v1297
      %v1299 = vrot.slane %v1182, 1
      %v1300 = vsel %vm757, %v1297, %v1299
      %v1301 = vrot.slane %v1183, 1
      %v1302 = vrot.slane %v1184, 1
      %v1303 = vsel %vm757, %v1301, %v1302
      %v1304 = vrot.slane %v1185, 1
      %v1305 = vsel %vm757, %v1302, %v1304
      %v1306 = vrot.slane %v1186, 1
      %v1307 = vrot.slane %v1187, 1
      %v1308 = vsel %vm757, %v1306, %v1307
      %v1309 = vrot.slane %v1188, 1
      %v1310 = vsel %vm757, %v1307, %v1309
      %v1311 = vrot.slane %v1189, 1
      %v1312 = vrot.slane %v1190, 1
      %v1313 = vsel %vm757, %v1311, %v1312
      %v1314 = vrot.slane %v1191, 1
      %v1315 = vsel %vm757, %v1312, %v1314
      %v1316 = vrot.slane %v1192, 1
      %v1317 = vrot.slane %v1193, 1
      %v1318 = vsel %vm757, %v1316, %v1317
      %v1319 = vrot.slane %v1194, 1
      %v1320 = vsel %vm757, %v1317, %v1319
      %v1321 = vrot.slane %v1195, 1
      %v1322 = vrot.slane %v1196, 1
      %v1323 = vsel %vm757, %v1321, %v1322
      %v1324 = vrot.slane %v1197, 1
      %v1325 = vsel %vm757, %v1322, %v1324
      %v1358 = vadd.f32 %v1114, %v1248
      %v1359 = vadd.f32 %v1115, %v1250
      %v1360 = vadd.f32 %v1116, %v1253
      %v1361 = vadd.f32 %v1117, %v1255
      %v1362 = vadd.f32 %v1118, %v1258
      %v1363 = vadd.f32 %v1119, %v1260
      %v1364 = vadd.f32 %v1120, %v1263
      %v1365 = vadd.f32 %v1121, %v1265
      %v1366 = vadd.f32 %v1122, %v1268
      %v1367 = vadd.f32 %v1123, %v1270
      %v1368 = vadd.f32 %v1124, %v1273
      %v1369 = vadd.f32 %v1125, %v1275
      %v1370 = vadd.f32 %v1126, %v1278
      %v1371 = vadd.f32 %v1127, %v1280
      %v1372 = vadd.f32 %v1128, %v1283
      %v1373 = vadd.f32 %v1129, %v1285
      %v1374 = vadd.f32 %v1130, %v1288
      %v1375 = vadd.f32 %v1131, %v1290
      %v1376 = vadd.f32 %v1132, %v1293
      %v1377 = vadd.f32 %v1133, %v1295
      %v1378 = vadd.f32 %v1134, %v1298
      %v1379 = vadd.f32 %v1135, %v1300
      %v1380 = vadd.f32 %v1136, %v1303
      %v1381 = vadd.f32 %v1137, %v1305
      %v1382 = vadd.f32 %v1138, %v1308
      %v1383 = vadd.f32 %v1139, %v1310
      %v1384 = vadd.f32 %v1140, %v1313
      %v1385 = vadd.f32 %v1141, %v1315
      %v1386 = vadd.f32 %v1142, %v1318
      %v1387 = vadd.f32 %v1143, %v1320
      %v1388 = vadd.f32 %v1144, %v1323
      %v1389 = vadd.f32 %v1145, %v1325
      %v1390 = vlaneseq
      %v1391 = vshrl.u32 %v1390, 7
      %v1392 = vsub.s32 2, %v1391
      %v1393 = vrot.slane %v451, %v1392
      %v1394 = vmul.f32 %v397, %v1393
      %v1395 = vmul.f32 %v398, %v1393
      %v1396 = vmul.f32 %v399, %v1393
      %v1397 = vmul.f32 %v400, %v1393
      %v1398 = vmul.f32 %v401, %v1393
      %v1399 = vmul.f32 %v402, %v1393
      %v1400 = vmul.f32 %v403, %v1393
      %v1401 = vmul.f32 %v404, %v1393
      %v1402 = vmul.f32 %v405, %v1393
      %v1403 = vmul.f32 %v406, %v1393
      %v1404 = vmul.f32 %v407, %v1393
      %v1405 = vmul.f32 %v408, %v1393
      %v1406 = vmul.f32 %v409, %v1393
      %v1407 = vmul.f32 %v410, %v1393
      %v1408 = vmul.f32 %v411, %v1393
      %v1409 = vmul.f32 %v412, %v1393
      %v1410 = vmul.f32 %v413, %v1393
      %v1411 = vmul.f32 %v414, %v1393
      %v1412 = vmul.f32 %v415, %v1393
      %v1413 = vmul.f32 %v416, %v1393
      %v1414 = vmul.f32 %v417, %v1393
      %v1415 = vmul.f32 %v418, %v1393
      %v1416 = vmul.f32 %v419, %v1393
      %v1417 = vmul.f32 %v420, %v1393
      %v1418 = vmul.f32 %v421, %v1393
      %v1419 = vmul.f32 %v422, %v1393
      %v1420 = vmul.f32 %v423, %v1393
      %v1421 = vmul.f32 %v424, %v1393
      %v1422 = vmul.f32 %v425, %v1393
      %v1423 = vmul.f32 %v426, %v1393
      %v1424 = vmul.f32 %v427, %v1393
      %v1425 = vmul.f32 %v428, %v1393
      %v1426 = vmul.f32 %v429, %v1393
      %v1427 = vmul.f32 %v430, %v1393
      %v1428 = vmul.f32 %v431, %v1393
      %v1429 = vmul.f32 %v432, %v1393
      %v1430 = vmul.f32 %v433, %v1393
      %v1431 = vmul.f32 %v434, %v1393
      %v1432 = vmul.f32 %v435, %v1393
      %v1433 = vmul.f32 %v436, %v1393
      %v1434 = vmul.f32 %v437, %v1393
      %v1435 = vmul.f32 %v438, %v1393
      %v1436 = vmul.f32 %v439, %v1393
      %v1437 = vmul.f32 %v440, %v1393
      %v1438 = vmul.f32 %v441, %v1393
      %v1439 = vmul.f32 %v442, %v1393
      %v1440 = vmul.f32 %v443, %v1393
      %v1441 = vmul.f32 %v444, %v1393
      %vm1490 = vcmask 1045504
      %v1491 = vrot.slane %v1394, 2
      %v1492 = vrot.slane %v1395, 2
      %v1493 = vsel %vm1490, %v1491, %v1492
      %v1494 = vrot.slane %v1396, 2
      %v1495 = vsel %vm1490, %v1492, %v1494
      %v1496 = vrot.slane %v1397, 2
      %v1497 = vrot.slane %v1398, 2
      %v1498 = vsel %vm1490, %v1496, %v1497
      %v1499 = vrot.slane %v1399, 2
      %v1500 = vsel %vm1490, %v1497, %v1499
      %v1501 = vrot.slane %v1400, 2
      %v1502 = vrot.slane %v1401, 2
      %v1503 = vsel %vm1490, %v1501, %v1502
      %v1504 = vrot.slane %v1402, 2
      %v1505 = vsel %vm1490, %v1502, %v1504
      %v1506 = vrot.slane %v1403, 2
      %v1507 = vrot.slane %v1404, 2
      %v1508 = vsel %vm1490, %v1506, %v1507
      %v1509 = vrot.slane %v1405, 2
      %v1510 = vsel %vm1490, %v1507, %v1509
      %v1511 = vrot.slane %v1406, 2
      %v1512 = vrot.slane %v1407, 2
      %v1513 = vsel %vm1490, %v1511, %v1512
      %v1514 = vrot.slane %v1408, 2
      %v1515 = vsel %vm1490, %v1512, %v1514
      %v1516 = vrot.slane %v1409, 2
      %v1517 = vrot.slane %v1410, 2
      %v1518 = vsel %vm1490, %v1516, %v1517
      %v1519 = vrot.slane %v1411, 2
      %v1520 = vsel %vm1490, %v1517, %v1519
      %v1521 = vrot.slane %v1412, 2
      %v1522 = vrot.slane %v1413, 2
      %v1523 = vsel %vm1490, %v1521, %v1522
      %v1524 = vrot.slane %v1414, 2
      %v1525 = vsel %vm1490, %v1522, %v1524
      %v1526 = vrot.slane %v1415, 2
      %v1527 = vrot.slane %v1416, 2
      %v1528 = vsel %vm1490, %v1526, %v1527
      %v1529 = vrot.slane %v1417, 2
      %v1530 = vsel %vm1490, %v1527, %v1529
      %v1531 = vrot.slane %v1418, 2
      %v1532 = vrot.slane %v1419, 2
      %v1533 = vsel %vm1490, %v1531, %v1532
      %v1534 = vrot.slane %v1420, 2
      %v1535 = vsel %vm1490, %v1532, %v1534
      %v1536 = vrot.slane %v1421, 2
      %v1537 = vrot.slane %v1422, 2
      %v1538 = vsel %vm1490, %v1536, %v1537
      %v1539 = vrot.slane %v1423, 2
      %v1540 = vsel %vm1490, %v1537, %v1539
      %v1541 = vrot.slane %v1424, 2
      %v1542 = vrot.slane %v1425, 2
      %v1543 = vsel %vm1490, %v1541, %v1542
      %v1544 = vrot.slane %v1426, 2
      %v1545 = vsel %vm1490, %v1542, %v1544
      %v1546 = vrot.slane %v1427, 2
      %v1547 = vrot.slane %v1428, 2
      %v1548 = vsel %vm1490, %v1546, %v1547
      %v1549 = vrot.slane %v1429, 2
      %v1550 = vsel %vm1490, %v1547, %v1549
      %v1551 = vrot.slane %v1430, 2
      %v1552 = vrot.slane %v1431, 2
      %v1553 = vsel %vm1490, %v1551, %v1552
      %v1554 = vrot.slane %v1432, 2
      %v1555 = vsel %vm1490, %v1552, %v1554
      %v1556 = vrot.slane %v1433, 2
      %v1557 = vrot.slane %v1434, 2
      %v1558 = vsel %vm1490, %v1556, %v1557
      %v1559 = vrot.slane %v1435, 2
      %v1560 = vsel %vm1490, %v1557, %v1559
      %v1561 = vrot.slane %v1436, 2
      %v1562 = vrot.slane %v1437, 2
      %v1563 = vsel %vm1490, %v1561, %v1562
      %v1564 = vrot.slane %v1438, 2
      %v1565 = vsel %vm1490, %v1562, %v1564
      %v1566 = vrot.slane %v1439, 2
      %v1567 = vrot.slane %v1440, 2
      %v1568 = vsel %vm1490, %v1566, %v1567
      %v1569 = vrot.slane %v1441, 2
      %v1570 = vsel %vm1490, %v1567, %v1569
      %v1603 = vadd.f32 %v1358, %v1493
      %v1604 = vadd.f32 %v1359, %v1495
      %v1605 = vadd.f32 %v1360, %v1498
      %v1606 = vadd.f32 %v1361, %v1500
      %v1607 = vadd.f32 %v1362, %v1503
      %v1608 = vadd.f32 %v1363, %v1505
      %v1609 = vadd.f32 %v1364, %v1508
      %v1610 = vadd.f32 %v1365, %v1510
      %v1611 = vadd.f32 %v1366, %v1513
      %v1612 = vadd.f32 %v1367, %v1515
      %v1613 = vadd.f32 %v1368, %v1518
      %v1614 = vadd.f32 %v1369, %v1520
      %v1615 = vadd.f32 %v1370, %v1523
      %v1616 = vadd.f32 %v1371, %v1525
      %v1617 = vadd.f32 %v1372, %v1528
      %v1618 = vadd.f32 %v1373, %v1530
      %v1619 = vadd.f32 %v1374, %v1533
      %v1620 = vadd.f32 %v1375, %v1535
      %v1621 = vadd.f32 %v1376, %v1538
      %v1622 = vadd.f32 %v1377, %v1540
      %v1623 = vadd.f32 %v1378, %v1543
      %v1624 = vadd.f32 %v1379, %v1545
      %v1625 = vadd.f32 %v1380, %v1548
      %v1626 = vadd.f32 %v1381, %v1550
      %v1627 = vadd.f32 %v1382, %v1553
      %v1628 = vadd.f32 %v1383, %v1555
      %v1629 = vadd.f32 %v1384, %v1558
      %v1630 = vadd.f32 %v1385, %v1560
      %v1631 = vadd.f32 %v1386, %v1563
      %v1632 = vadd.f32 %v1387, %v1565
      %v1633 = vadd.f32 %v1388, %v1568
      %v1634 = vadd.f32 %v1389, %v1570
      %v1635 = vlaneseq
      %v1636 = vshrl.u32 %v1635, 7
      %v1637 = vsub.s32 5, %v1636
      %v1638 = vrot.slane %v451, %v1637
      %v1639 = vmul.f32 %v400, %v1638
      %v1640 = vmul.f32 %v401, %v1638
      %v1641 = vmul.f32 %v402, %v1638
      %v1642 = vmul.f32 %v403, %v1638
      %v1643 = vmul.f32 %v404, %v1638
      %v1644 = vmul.f32 %v405, %v1638
      %v1645 = vmul.f32 %v406, %v1638
      %v1646 = vmul.f32 %v407, %v1638
      %v1647 = vmul.f32 %v408, %v1638
      %v1648 = vmul.f32 %v409, %v1638
      %v1649 = vmul.f32 %v410, %v1638
      %v1650 = vmul.f32 %v411, %v1638
      %v1651 = vmul.f32 %v412, %v1638
      %v1652 = vmul.f32 %v413, %v1638
      %v1653 = vmul.f32 %v414, %v1638
      %v1654 = vmul.f32 %v415, %v1638
      %v1655 = vmul.f32 %v416, %v1638
      %v1656 = vmul.f32 %v417, %v1638
      %v1657 = vmul.f32 %v418, %v1638
      %v1658 = vmul.f32 %v419, %v1638
      %v1659 = vmul.f32 %v420, %v1638
      %v1660 = vmul.f32 %v421, %v1638
      %v1661 = vmul.f32 %v422, %v1638
      %v1662 = vmul.f32 %v423, %v1638
      %v1663 = vmul.f32 %v424, %v1638
      %v1664 = vmul.f32 %v425, %v1638
      %v1665 = vmul.f32 %v426, %v1638
      %v1666 = vmul.f32 %v427, %v1638
      %v1667 = vmul.f32 %v428, %v1638
      %v1668 = vmul.f32 %v429, %v1638
      %v1669 = vmul.f32 %v430, %v1638
      %v1670 = vmul.f32 %v431, %v1638
      %v1671 = vmul.f32 %v432, %v1638
      %v1672 = vmul.f32 %v433, %v1638
      %v1673 = vmul.f32 %v434, %v1638
      %v1674 = vmul.f32 %v435, %v1638
      %v1675 = vmul.f32 %v436, %v1638
      %v1676 = vmul.f32 %v437, %v1638
      %v1677 = vmul.f32 %v438, %v1638
      %v1678 = vmul.f32 %v439, %v1638
      %v1679 = vmul.f32 %v440, %v1638
      %v1680 = vmul.f32 %v441, %v1638
      %v1681 = vmul.f32 %v442, %v1638
      %v1682 = vmul.f32 %v443, %v1638
      %v1683 = vmul.f32 %v444, %v1638
      %v1684 = vmul.f32 %v445, %v1638
      %v1685 = vmul.f32 %v446, %v1638
      %v1686 = vmul.f32 %v447, %v1638
      %v1735 = vrot.slane %v1639, 2
      %v1736 = vrot.slane %v1640, 2
      %v1737 = vsel %vm1490, %v1735, %v1736
      %v1738 = vrot.slane %v1641, 2
      %v1739 = vsel %vm1490, %v1736, %v1738
      %v1740 = vrot.slane %v1642, 2
      %v1741 = vrot.slane %v1643, 2
      %v1742 = vsel %vm1490, %v1740, %v1741
      %v1743 = vrot.slane %v1644, 2
      %v1744 = vsel %vm1490, %v1741, %v1743
      %v1745 = vrot.slane %v1645, 2
      %v1746 = vrot.slane %v1646, 2
      %v1747 = vsel %vm1490, %v1745, %v1746
      %v1748 = vrot.slane %v1647, 2
      %v1749 = vsel %vm1490, %v1746, %v1748
      %v1750 = vrot.slane %v1648, 2
      %v1751 = vrot.slane %v1649, 2
      %v1752 = vsel %vm1490, %v1750, %v1751
      %v1753 = vrot.slane %v1650, 2
      %v1754 = vsel %vm1490, %v1751, %v1753
      %v1755 = vrot.slane %v1651, 2
      %v1756 = vrot.slane %v1652, 2
      %v1757 = vsel %vm1490, %v1755, %v1756
      %v1758 = vrot.slane %v1653, 2
      %v1759 = vsel %vm1490, %v1756, %v1758
      %v1760 = vrot.slane %v1654, 2
      %v1761 = vrot.slane %v1655, 2
      %v1762 = vsel %vm1490, %v1760, %v1761
      %v1763 = vrot.slane %v1656, 2
      %v1764 = vsel %vm1490, %v1761, %v1763
      %v1765 = vrot.slane %v1657, 2
      %v1766 = vrot.slane %v1658, 2
      %v1767 = vsel %vm1490, %v1765, %v1766
      %v1768 = vrot.slane %v1659, 2
      %v1769 = vsel %vm1490, %v1766, %v1768
      %v1770 = vrot.slane %v1660, 2
      %v1771 = vrot.slane %v1661, 2
      %v1772 = vsel %vm1490, %v1770, %v1771
      %v1773 = vrot.slane %v1662, 2
      %v1774 = vsel %vm1490, %v1771, %v1773
      %v1775 = vrot.slane %v1663, 2
      %v1776 = vrot.slane %v1664, 2
      %v1777 = vsel %vm1490, %v1775, %v1776
      %v1778 = vrot.slane %v1665, 2
      %v1779 = vsel %vm1490, %v1776, %v1778
      %v1780 = vrot.slane %v1666, 2
      %v1781 = vrot.slane %v1667, 2
      %v1782 = vsel %vm1490, %v1780, %v1781
      %v1783 = vrot.slane %v1668, 2
      %v1784 = vsel %vm1490, %v1781, %v1783
      %v1785 = vrot.slane %v1669, 2
      %v1786 = vrot.slane %v1670, 2
      %v1787 = vsel %vm1490, %v1785, %v1786
      %v1788 = vrot.slane %v1671, 2
      %v1789 = vsel %vm1490, %v1786, %v1788
      %v1790 = vrot.slane %v1672, 2
      %v1791 = vrot.slane %v1673, 2
      %v1792 = vsel %vm1490, %v1790, %v1791
      %v1793 = vrot.slane %v1674, 2
      %v1794 = vsel %vm1490, %v1791, %v1793
      %v1795 = vrot.slane %v1675, 2
      %v1796 = vrot.slane %v1676, 2
      %v1797 = vsel %vm1490, %v1795, %v1796
      %v1798 = vrot.slane %v1677, 2
      %v1799 = vsel %vm1490, %v1796, %v1798
      %v1800 = vrot.slane %v1678, 2
      %v1801 = vrot.slane %v1679, 2
      %v1802 = vsel %vm1490, %v1800, %v1801
      %v1803 = vrot.slane %v1680, 2
      %v1804 = vsel %vm1490, %v1801, %v1803
      %v1805 = vrot.slane %v1681, 2
      %v1806 = vrot.slane %v1682, 2
      %v1807 = vsel %vm1490, %v1805, %v1806
      %v1808 = vrot.slane %v1683, 2
      %v1809 = vsel %vm1490, %v1806, %v1808
      %v1810 = vrot.slane %v1684, 2
      %v1811 = vrot.slane %v1685, 2
      %v1812 = vsel %vm1490, %v1810, %v1811
      %v1813 = vrot.slane %v1686, 2
      %v1814 = vsel %vm1490, %v1811, %v1813
      %v1847 = vadd.f32 %v1603, %v1737
      %v1848 = vadd.f32 %v1604, %v1739
      %v1849 = vadd.f32 %v1605, %v1742
      %v1850 = vadd.f32 %v1606, %v1744
      %v1851 = vadd.f32 %v1607, %v1747
      %v1852 = vadd.f32 %v1608, %v1749
      %v1853 = vadd.f32 %v1609, %v1752
      %v1854 = vadd.f32 %v1610, %v1754
      %v1855 = vadd.f32 %v1611, %v1757
      %v1856 = vadd.f32 %v1612, %v1759
      %v1857 = vadd.f32 %v1613, %v1762
      %v1858 = vadd.f32 %v1614, %v1764
      %v1859 = vadd.f32 %v1615, %v1767
      %v1860 = vadd.f32 %v1616, %v1769
      %v1861 = vadd.f32 %v1617, %v1772
      %v1862 = vadd.f32 %v1618, %v1774
      %v1863 = vadd.f32 %v1619, %v1777
      %v1864 = vadd.f32 %v1620, %v1779
      %v1865 = vadd.f32 %v1621, %v1782
      %v1866 = vadd.f32 %v1622, %v1784
      %v1867 = vadd.f32 %v1623, %v1787
      %v1868 = vadd.f32 %v1624, %v1789
      %v1869 = vadd.f32 %v1625, %v1792
      %v1870 = vadd.f32 %v1626, %v1794
      %v1871 = vadd.f32 %v1627, %v1797
      %v1872 = vadd.f32 %v1628, %v1799
      %v1873 = vadd.f32 %v1629, %v1802
      %v1874 = vadd.f32 %v1630, %v1804
      %v1875 = vadd.f32 %v1631, %v1807
      %v1876 = vadd.f32 %v1632, %v1809
      %v1877 = vadd.f32 %v1633, %v1812
      %v1878 = vadd.f32 %v1634, %v1814
      %v1879 = vlaneseq
      %v1880 = vshrl.u32 %v1879, 7
      %v1881 = vsub.s32 0, %v1880
      %v1882 = vrot.slane %v452, %v1881
      %v1883 = vmul.f32 %v403, %v1882
      %v1884 = vmul.f32 %v404, %v1882
      %v1885 = vmul.f32 %v405, %v1882
      %v1886 = vmul.f32 %v406, %v1882
      %v1887 = vmul.f32 %v407, %v1882
      %v1888 = vmul.f32 %v408, %v1882
      %v1889 = vmul.f32 %v409, %v1882
      %v1890 = vmul.f32 %v410, %v1882
      %v1891 = vmul.f32 %v411, %v1882
      %v1892 = vmul.f32 %v412, %v1882
      %v1893 = vmul.f32 %v413, %v1882
      %v1894 = vmul.f32 %v414, %v1882
      %v1895 = vmul.f32 %v415, %v1882
      %v1896 = vmul.f32 %v416, %v1882
      %v1897 = vmul.f32 %v417, %v1882
      %v1898 = vmul.f32 %v418, %v1882
      %v1899 = vmul.f32 %v419, %v1882
      %v1900 = vmul.f32 %v420, %v1882
      %v1901 = vmul.f32 %v421, %v1882
      %v1902 = vmul.f32 %v422, %v1882
      %v1903 = vmul.f32 %v423, %v1882
      %v1904 = vmul.f32 %v424, %v1882
      %v1905 = vmul.f32 %v425, %v1882
      %v1906 = vmul.f32 %v426, %v1882
      %v1907 = vmul.f32 %v427, %v1882
      %v1908 = vmul.f32 %v428, %v1882
      %v1909 = vmul.f32 %v429, %v1882
      %v1910 = vmul.f32 %v430, %v1882
      %v1911 = vmul.f32 %v431, %v1882
      %v1912 = vmul.f32 %v432, %v1882
      %v1913 = vmul.f32 %v433, %v1882
      %v1914 = vmul.f32 %v434, %v1882
      %v1915 = vmul.f32 %v435, %v1882
      %v1916 = vmul.f32 %v436, %v1882
      %v1917 = vmul.f32 %v437, %v1882
      %v1918 = vmul.f32 %v438, %v1882
      %v1919 = vmul.f32 %v439, %v1882
      %v1920 = vmul.f32 %v440, %v1882
      %v1921 = vmul.f32 %v441, %v1882
      %v1922 = vmul.f32 %v442, %v1882
      %v1923 = vmul.f32 %v443, %v1882
      %v1924 = vmul.f32 %v444, %v1882
      %v1925 = vmul.f32 %v445, %v1882
      %v1926 = vmul.f32 %v446, %v1882
      %v1927 = vmul.f32 %v447, %v1882
      %v1928 = vmul.f32 %v448, %v1882
      %v1929 = vmul.f32 %v449, %v1882
      %v1930 = vmul.f32 %v450, %v1882
      %v1979 = vrot.slane %v1883, 2
      %v1980 = vrot.slane %v1884, 2
      %v1981 = vsel %vm1490, %v1979, %v1980
      %v1982 = vrot.slane %v1885, 2
      %v1983 = vsel %vm1490, %v1980, %v1982
      %v1984 = vrot.slane %v1886, 2
      %v1985 = vrot.slane %v1887, 2
      %v1986 = vsel %vm1490, %v1984, %v1985
      %v1987 = vrot.slane %v1888, 2
      %v1988 = vsel %vm1490, %v1985, %v1987
      %v1989 = vrot.slane %v1889, 2
      %v1990 = vrot.slane %v1890, 2
      %v1991 = vsel %vm1490, %v1989, %v1990
      %v1992 = vrot.slane %v1891, 2
      %v1993 = vsel %vm1490, %v1990, %v1992
      %v1994 = vrot.slane %v1892, 2
      %v1995 = vrot.slane %v1893, 2
      %v1996 = vsel %vm1490, %v1994, %v1995
      %v1997 = vrot.slane %v1894, 2
      %v1998 = vsel %vm1490, %v1995, %v1997
      %v1999 = vrot.slane %v1895, 2
      %v2000 = vrot.slane %v1896, 2
      %v2001 = vsel %vm1490, %v1999, %v2000
      %v2002 = vrot.slane %v1897, 2
      %v2003 = vsel %vm1490, %v2000, %v2002
      %v2004 = vrot.slane %v1898, 2
      %v2005 = vrot.slane %v1899, 2
      %v2006 = vsel %vm1490, %v2004, %v2005
      %v2007 = vrot.slane %v1900, 2
      %v2008 = vsel %vm1490, %v2005, %v2007
      %v2009 = vrot.slane %v1901, 2
      %v2010 = vrot.slane %v1902, 2
      %v2011 = vsel %vm1490, %v2009, %v2010
      %v2012 = vrot.slane %v1903, 2
      %v2013 = vsel %vm1490, %v2010, %v2012
      %v2014 = vrot.slane %v1904, 2
      %v2015 = vrot.slane %v1905, 2
      %v2016 = vsel %vm1490, %v2014, %v2015
      %v2017 = vrot.slane %v1906, 2
      %v2018 = vsel %vm1490, %v2015, %v2017
      %v2019 = vrot.slane %v1907, 2
      %v2020 = vrot.slane %v1908, 2
      %v2021 = vsel %vm1490, %v2019, %v2020
      %v2022 = vrot.slane %v1909, 2
      %v2023 = vsel %vm1490, %v2020, %v2022
      %v2024 = vrot.slane %v1910, 2
      %v2025 = vrot.slane %v1911, 2
      %v2026 = vsel %vm1490, %v2024, %v2025
      %v2027 = vrot.slane %v1912, 2
      %v2028 = vsel %vm1490, %v2025, %v2027
      %v2029 = vrot.slane %v1913, 2
      %v2030 = vrot.slane %v1914, 2
      %v2031 = vsel %vm1490, %v2029, %v2030
      %v2032 = vrot.slane %v1915, 2
      %v2033 = vsel %vm1490, %v2030, %v2032
      %v2034 = vrot.slane %v1916, 2
      %v2035 = vrot.slane %v1917, 2
      %v2036 = vsel %vm1490, %v2034, %v2035
      %v2037 = vrot.slane %v1918, 2
      %v2038 = vsel %vm1490, %v2035, %v2037
      %v2039 = vrot.slane %v1919, 2
      %v2040 = vrot.slane %v1920, 2
      %v2041 = vsel %vm1490, %v2039, %v2040
      %v2042 = vrot.slane %v1921, 2
      %v2043 = vsel %vm1490, %v2040, %v2042
      %v2044 = vrot.slane %v1922, 2
      %v2045 = vrot.slane %v1923, 2
      %v2046 = vsel %vm1490, %v2044, %v2045
      %v2047 = vrot.slane %v1924, 2
      %v2048 = vsel %vm1490, %v2045, %v2047
      %v2049 = vrot.slane %v1925, 2
      %v2050 = vrot.slane %v1926, 2
      %v2051 = vsel %vm1490, %v2049, %v2050
      %v2052 = vrot.slane %v1927, 2
      %v2053 = vsel %vm1490, %v2050, %v2052
      %v2054 = vrot.slane %v1928, 2
      %v2055 = vrot.slane %v1929, 2
      %v2056 = vsel %vm1490, %v2054, %v2055
      %v2057 = vrot.slane %v1930, 2
      %v2058 = vsel %vm1490, %v2055, %v2057
      %v2091 = vadd.f32 %v1847, %v1981
      %v2092 = vadd.f32 %v1848, %v1983
      %v2093 = vadd.f32 %v1849, %v1986
      %v2094 = vadd.f32 %v1850, %v1988
      %v2095 = vadd.f32 %v1851, %v1991
      %v2096 = vadd.f32 %v1852, %v1993
      %v2097 = vadd.f32 %v1853, %v1996
      %v2098 = vadd.f32 %v1854, %v1998
      %v2099 = vadd.f32 %v1855, %v2001
      %v2100 = vadd.f32 %v1856, %v2003
      %v2101 = vadd.f32 %v1857, %v2006
      %v2102 = vadd.f32 %v1858, %v2008
      %v2103 = vadd.f32 %v1859, %v2011
      %v2104 = vadd.f32 %v1860, %v2013
      %v2105 = vadd.f32 %v1861, %v2016
      %v2106 = vadd.f32 %v1862, %v2018
      %v2107 = vadd.f32 %v1863, %v2021
      %v2108 = vadd.f32 %v1864, %v2023
      %v2109 = vadd.f32 %v1865, %v2026
      %v2110 = vadd.f32 %v1866, %v2028
      %v2111 = vadd.f32 %v1867, %v2031
      %v2112 = vadd.f32 %v1868, %v2033
      %v2113 = vadd.f32 %v1869, %v2036
      %v2114 = vadd.f32 %v1870, %v2038
      %v2115 = vadd.f32 %v1871, %v2041
      %v2116 = vadd.f32 %v1872, %v2043
      %v2117 = vadd.f32 %v1873, %v2046
      %v2118 = vadd.f32 %v1874, %v2048
      %v2119 = vadd.f32 %v1875, %v2051
      %v2120 = vadd.f32 %v1876, %v2053
      %v2121 = vadd.f32 %v1877, %v2056
      %v2122 = vadd.f32 %v1878, %v2058
      %v2123 = vld [vmem:[%s4] sm:$0xff]
      %v2124 = vld [vmem:[%s4 + $0x8] sm:$0xff]
      %v2125 = vld [vmem:[%s4 + $0x10] sm:$0xff]
      %v2126 = vld [vmem:[%s4 + $0x18] sm:$0xff]
      %v2127 = vld [vmem:[%s4 + $0x20] sm:$0xff]
      %v2128 = vld [vmem:[%s4 + $0x28] sm:$0xff]
      %v2129 = vld [vmem:[%s4 + $0x30] sm:$0xff]
      %v2130 = vld [vmem:[%s4 + $0x38] sm:$0xff]
      %v2131 = vld [vmem:[%s4 + $0x40] sm:$0xff]
      %v2132 = vld [vmem:[%s4 + $0x48] sm:$0xff]
      %v2133 = vld [vmem:[%s4 + $0x50] sm:$0xff]
      %v2134 = vld [vmem:[%s4 + $0x58] sm:$0xff]
      %v2135 = vld [vmem:[%s4 + $0x60] sm:$0xff]
      %v2136 = vld [vmem:[%s4 + $0x68] sm:$0xff]
      %v2137 = vld [vmem:[%s4 + $0x70] sm:$0xff]
      %v2138 = vld [vmem:[%s4 + $0x78] sm:$0xff]
      %2139 = vmatprep.subr.mxu0 0.0
      %2140 = vmatpush1.msra.mxu0 %v2123
      %2141 = vmatprep.subr.mxu0 0.0
      %2142 = vmatpush1.msra.mxu0 %v2124
      %2143 = vmatprep.subr.mxu0 0.0
      %2144 = vmatpush1.msra.mxu0 %v2125
      %2145 = vmatprep.subr.mxu0 0.0
      %2146 = vmatpush1.msra.mxu0 %v2126
      %2147 = vmatprep.subr.mxu0 0.0
      %2148 = vmatpush1.msra.mxu0 %v2127
      %2149 = vmatprep.subr.mxu0 0.0
      %2150 = vmatpush1.msra.mxu0 %v2128
      %2151 = vmatprep.subr.mxu0 0.0
      %2152 = vmatpush1.msra.mxu0 %v2129
      %2153 = vmatprep.subr.mxu0 0.0
      %2154 = vmatpush1.msra.mxu0 %v2130
      %2155 = vmatprep.subr.mxu0 0.0
      %2156 = vmatpush1.msra.mxu0 %v2131
      %2157 = vmatprep.subr.mxu0 0.0
      %2158 = vmatpush1.msra.mxu0 %v2132
      %2159 = vmatprep.subr.mxu0 0.0
      %2160 = vmatpush1.msra.mxu0 %v2133
      %2161 = vmatprep.subr.mxu0 0.0
      %2162 = vmatpush1.msra.mxu0 %v2134
      %2163 = vmatprep.subr.mxu0 0.0
      %2164 = vmatpush1.msra.mxu0 %v2135
      %2165 = vmatprep.subr.mxu0 0.0
      %2166 = vmatpush1.msra.mxu0 %v2136
      %2167 = vmatprep.subr.mxu0 0.0
      %2168 = vmatpush1.msra.mxu0 %v2137
      %2169 = vmatprep.subr.mxu0 0.0
      %2170 = vmatpush1.msra.mxu0 %v2138
      %2171 = vmatprep.subr.mxu0 0.0
      %2172 = vmatpush1.msra.mxu0 0.0
      %2173 = vmatprep.subr.mxu0 0.0
      %2174 = vmatpush1.msra.mxu0 0.0
      %2175 = vmatprep.subr.mxu0 0.0
      %2176 = vmatpush1.msra.mxu0 0.0
      %2177 = vmatprep.subr.mxu0 0.0
      %2178 = vmatpush1.msra.mxu0 0.0
      %2179 = vmatprep.subr.mxu0 0.0
      %2180 = vmatpush1.msra.mxu0 0.0
      %2181 = vmatprep.subr.mxu0 0.0
      %2182 = vmatpush1.msra.mxu0 0.0
      %2183 = vmatprep.subr.mxu0 0.0
      %2184 = vmatpush1.msra.mxu0 0.0
      %2185 = vmatprep.subr.mxu0 0.0
      %2186 = vmatpush1.msra.mxu0 0.0
      %2187 = vmatprep.subr.mxu0 0.0
      %2188 = vmatpush1.msra.mxu0 0.0
      %2189 = vmatprep.subr.mxu0 0.0
      %2190 = vmatpush1.msra.mxu0 0.0
      %2191 = vmatprep.subr.mxu0 0.0
      %2192 = vmatpush1.msra.mxu0 0.0
      %2193 = vmatprep.subr.mxu0 0.0
      %2194 = vmatpush1.msra.mxu0 0.0
      %2195 = vmatprep.subr.mxu0 0.0
      %2196 = vmatpush1.msra.mxu0 0.0
      %2197 = vmatprep.subr.mxu0 0.0
      %2198 = vmatpush1.msra.mxu0 0.0
      %2199 = vmatprep.subr.mxu0 0.0
      %2200 = vmatpush1.msra.mxu0 0.0
      %2201 = vmatprep.subr.mxu0 0.0
      %2202 = vmatpush1.msra.mxu0 0.0
      %2203 = vmatprep.mubr.f32.mxu0 0.0
      %2204 = vmatmul.mubr.f32.gmra.mrb[0].mxu0 %v2091
      %v2205 = vpop.f32.mrb[0].mxu0
      %v2206 = vadd.f32 0.0, %v2205
      %v2207 = vpop.f32.mrb[0].mxu0
      %2208 = vmatprep.mubr.f32.mxu0 0.0
      %2209 = vmatmul.mubr.f32.gmra.mrb[0].mxu0 %v2092
      %v2210 = vpop.f32.mrb[0].mxu0
      %v2211 = vadd.f32 0.0, %v2210
      %v2212 = vpop.f32.mrb[0].mxu0
      %2213 = vmatprep.mubr.f32.mxu0 0.0
      %2214 = vmatmul.mubr.f32.gmra.mrb[0].mxu0 %v2093
      %v2215 = vpop.f32.mrb[0].mxu0
      %v2216 = vadd.f32 0.0, %v2215
      %v2217 = vpop.f32.mrb[0].mxu0
      %2218 = vmatprep.mubr.f32.mxu0 0.0
      %2219 = vmatmul.mubr.f32.gmra.mrb[0].mxu0 %v2094
      %v2220 = vpop.f32.mrb[0].mxu0
      %v2221 = vadd.f32 0.0, %v2220
      %v2222 = vpop.f32.mrb[0].mxu0
      %2223 = vmatprep.mubr.f32.mxu0 0.0
      %2224 = vmatmul.mubr.f32.gmra.mrb[0].mxu0 %v2095
      %v2225 = vpop.f32.mrb[0].mxu0
      %v2226 = vadd.f32 0.0, %v2225
      %v2227 = vpop.f32.mrb[0].mxu0
      %2228 = vmatprep.mubr.f32.mxu0 0.0
      %2229 = vmatmul.mubr.f32.gmra.mrb[0].mxu0 %v2096
      %v2230 = vpop.f32.mrb[0].mxu0
      %v2231 = vadd.f32 0.0, %v2230
      %v2232 = vpop.f32.mrb[0].mxu0
      %2233 = vmatprep.mubr.f32.mxu0 0.0
      %2234 = vmatmul.mubr.f32.gmra.mrb[0].mxu0 %v2097
      %v2235 = vpop.f32.mrb[0].mxu0
      %v2236 = vadd.f32 0.0, %v2235
      %v2237 = vpop.f32.mrb[0].mxu0
      %2238 = vmatprep.mubr.f32.mxu0 0.0
      %2239 = vmatmul.mubr.f32.gmra.mrb[0].mxu0 %v2098
      %v2240 = vpop.f32.mrb[0].mxu0
      %v2241 = vadd.f32 0.0, %v2240
      %v2242 = vpop.f32.mrb[0].mxu0
      %2243 = vmatprep.mubr.f32.mxu0 0.0
      %2244 = vmatmul.mubr.f32.gmra.mrb[0].mxu0 %v2099
      %v2245 = vpop.f32.mrb[0].mxu0
      %v2246 = vadd.f32 0.0, %v2245
      %v2247 = vpop.f32.mrb[0].mxu0
      %2248 = vmatprep.mubr.f32.mxu0 0.0
      %2249 = vmatmul.mubr.f32.gmra.mrb[0].mxu0 %v2100
      %v2250 = vpop.f32.mrb[0].mxu0
      %v2251 = vadd.f32 0.0, %v2250
      %v2252 = vpop.f32.mrb[0].mxu0
      %2253 = vmatprep.mubr.f32.mxu0 0.0
      %2254 = vmatmul.mubr.f32.gmra.mrb[0].mxu0 %v2101
      %v2255 = vpop.f32.mrb[0].mxu0
      %v2256 = vadd.f32 0.0, %v2255
      %v2257 = vpop.f32.mrb[0].mxu0
      %2258 = vmatprep.mubr.f32.mxu0 0.0
      %2259 = vmatmul.mubr.f32.gmra.mrb[0].mxu0 %v2102
      %v2260 = vpop.f32.mrb[0].mxu0
      %v2261 = vadd.f32 0.0, %v2260
      %v2262 = vpop.f32.mrb[0].mxu0
      %2263 = vmatprep.mubr.f32.mxu0 0.0
      %2264 = vmatmul.mubr.f32.gmra.mrb[0].mxu0 %v2103
      %v2265 = vpop.f32.mrb[0].mxu0
      %v2266 = vadd.f32 0.0, %v2265
      %v2267 = vpop.f32.mrb[0].mxu0
      %2268 = vmatprep.mubr.f32.mxu0 0.0
      %2269 = vmatmul.mubr.f32.gmra.mrb[0].mxu0 %v2104
      %v2270 = vpop.f32.mrb[0].mxu0
      %v2271 = vadd.f32 0.0, %v2270
      %v2272 = vpop.f32.mrb[0].mxu0
      %2273 = vmatprep.mubr.f32.mxu0 0.0
      %2274 = vmatmul.mubr.f32.gmra.mrb[0].mxu0 %v2105
      %v2275 = vpop.f32.mrb[0].mxu0
      %v2276 = vadd.f32 0.0, %v2275
      %v2277 = vpop.f32.mrb[0].mxu0
      %2278 = vmatprep.mubr.f32.mxu0 0.0
      %2279 = vmatmul.mubr.f32.gmra.mrb[0].mxu0 %v2106
      %v2280 = vpop.f32.mrb[0].mxu0
      %v2281 = vadd.f32 0.0, %v2280
      %v2282 = vpop.f32.mrb[0].mxu0
      %2283 = vmatprep.mubr.f32.mxu0 0.0
      %2284 = vmatmul.mubr.f32.gmra.mrb[0].mxu0 %v2107
      %v2285 = vpop.f32.mrb[0].mxu0
      %v2286 = vadd.f32 0.0, %v2285
      %v2287 = vpop.f32.mrb[0].mxu0
      %2288 = vmatprep.mubr.f32.mxu0 0.0
      %2289 = vmatmul.mubr.f32.gmra.mrb[0].mxu0 %v2108
      %v2290 = vpop.f32.mrb[0].mxu0
      %v2291 = vadd.f32 0.0, %v2290
      %v2292 = vpop.f32.mrb[0].mxu0
      %2293 = vmatprep.mubr.f32.mxu0 0.0
      %2294 = vmatmul.mubr.f32.gmra.mrb[0].mxu0 %v2109
      %v2295 = vpop.f32.mrb[0].mxu0
      %v2296 = vadd.f32 0.0, %v2295
      %v2297 = vpop.f32.mrb[0].mxu0
      %2298 = vmatprep.mubr.f32.mxu0 0.0
      %2299 = vmatmul.mubr.f32.gmra.mrb[0].mxu0 %v2110
      %v2300 = vpop.f32.mrb[0].mxu0
      %v2301 = vadd.f32 0.0, %v2300
      %v2302 = vpop.f32.mrb[0].mxu0
      %2303 = vmatprep.mubr.f32.mxu0 0.0
      %2304 = vmatmul.mubr.f32.gmra.mrb[0].mxu0 %v2111
      %v2305 = vpop.f32.mrb[0].mxu0
      %v2306 = vadd.f32 0.0, %v2305
      %v2307 = vpop.f32.mrb[0].mxu0
      %2308 = vmatprep.mubr.f32.mxu0 0.0
      %2309 = vmatmul.mubr.f32.gmra.mrb[0].mxu0 %v2112
      %v2310 = vpop.f32.mrb[0].mxu0
      %v2311 = vadd.f32 0.0, %v2310
      %v2312 = vpop.f32.mrb[0].mxu0
      %2313 = vmatprep.mubr.f32.mxu0 0.0
      %2314 = vmatmul.mubr.f32.gmra.mrb[0].mxu0 %v2113
      %v2315 = vpop.f32.mrb[0].mxu0
      %v2316 = vadd.f32 0.0, %v2315
      %v2317 = vpop.f32.mrb[0].mxu0
      %2318 = vmatprep.mubr.f32.mxu0 0.0
      %2319 = vmatmul.mubr.f32.gmra.mrb[0].mxu0 %v2114
      %v2320 = vpop.f32.mrb[0].mxu0
      %v2321 = vadd.f32 0.0, %v2320
      %v2322 = vpop.f32.mrb[0].mxu0
      %2323 = vmatprep.mubr.f32.mxu0 0.0
      %2324 = vmatmul.mubr.f32.gmra.mrb[0].mxu0 %v2115
      %v2325 = vpop.f32.mrb[0].mxu0
      %v2326 = vadd.f32 0.0, %v2325
      %v2327 = vpop.f32.mrb[0].mxu0
      %2328 = vmatprep.mubr.f32.mxu0 0.0
      %2329 = vmatmul.mubr.f32.gmra.mrb[0].mxu0 %v2116
      %v2330 = vpop.f32.mrb[0].mxu0
      %v2331 = vadd.f32 0.0, %v2330
      %v2332 = vpop.f32.mrb[0].mxu0
      %2333 = vmatprep.mubr.f32.mxu0 0.0
      %2334 = vmatmul.mubr.f32.gmra.mrb[0].mxu0 %v2117
      %v2335 = vpop.f32.mrb[0].mxu0
      %v2336 = vadd.f32 0.0, %v2335
      %v2337 = vpop.f32.mrb[0].mxu0
      %2338 = vmatprep.mubr.f32.mxu0 0.0
      %2339 = vmatmul.mubr.f32.gmra.mrb[0].mxu0 %v2118
      %v2340 = vpop.f32.mrb[0].mxu0
      %v2341 = vadd.f32 0.0, %v2340
      %v2342 = vpop.f32.mrb[0].mxu0
      %2343 = vmatprep.mubr.f32.mxu0 0.0
      %2344 = vmatmul.mubr.f32.gmra.mrb[0].mxu0 %v2119
      %v2345 = vpop.f32.mrb[0].mxu0
      %v2346 = vadd.f32 0.0, %v2345
      %v2347 = vpop.f32.mrb[0].mxu0
      %2348 = vmatprep.mubr.f32.mxu0 0.0
      %2349 = vmatmul.mubr.f32.gmra.mrb[0].mxu0 %v2120
      %v2350 = vpop.f32.mrb[0].mxu0
      %v2351 = vadd.f32 0.0, %v2350
      %v2352 = vpop.f32.mrb[0].mxu0
      %2353 = vmatprep.mubr.f32.mxu0 0.0
      %2354 = vmatmul.mubr.f32.gmra.mrb[0].mxu0 %v2121
      %v2355 = vpop.f32.mrb[0].mxu0
      %v2356 = vadd.f32 0.0, %v2355
      %v2357 = vpop.f32.mrb[0].mxu0
      %2358 = vmatprep.mubr.f32.mxu0 0.0
      %2359 = vmatmul.mubr.f32.gmra.mrb[0].mxu0 %v2122
      %v2360 = vpop.f32.mrb[0].mxu0
      %v2361 = vadd.f32 0.0, %v2360
      %v2362 = vpop.f32.mrb[0].mxu0
      %2363 = vdwg.mxu0
      %2364 = vst [vmem:[%s395] sm:$0xff] %v2206
      %2365 = vst [vmem:[%s395 + $0x8] sm:$0xff] %v2211
      %2366 = vst [vmem:[%s395 + $0x10] sm:$0xff] %v2216
      %2367 = vst [vmem:[%s395 + $0x18] sm:$0xff] %v2221
      %2368 = vst [vmem:[%s395 + $0x20] sm:$0xff] %v2226
      %2369 = vst [vmem:[%s395 + $0x28] sm:$0xff] %v2231
      %2370 = vst [vmem:[%s395 + $0x30] sm:$0xff] %v2236
      %2371 = vst [vmem:[%s395 + $0x38] sm:$0xff] %v2241
      %2372 = vst [vmem:[%s395 + $0x40] sm:$0xff] %v2246
      %2373 = vst [vmem:[%s395 + $0x48] sm:$0xff] %v2251
      %2374 = vst [vmem:[%s395 + $0x50] sm:$0xff] %v2256
      %2375 = vst [vmem:[%s395 + $0x58] sm:$0xff] %v2261
      %2376 = vst [vmem:[%s395 + $0x60] sm:$0xff] %v2266
      %2377 = vst [vmem:[%s395 + $0x68] sm:$0xff] %v2271
      %2378 = vst [vmem:[%s395 + $0x70] sm:$0xff] %v2276
      %2379 = vst [vmem:[%s395 + $0x78] sm:$0xff] %v2281
      %2380 = vst [vmem:[%s395 + $0x80] sm:$0xff] %v2286
      %2381 = vst [vmem:[%s395 + $0x88] sm:$0xff] %v2291
      %2382 = vst [vmem:[%s395 + $0x90] sm:$0xff] %v2296
      %2383 = vst [vmem:[%s395 + $0x98] sm:$0xff] %v2301
      %2384 = vst [vmem:[%s395 + $0xa0] sm:$0xff] %v2306
      %2385 = vst [vmem:[%s395 + $0xa8] sm:$0xff] %v2311
      %2386 = vst [vmem:[%s395 + $0xb0] sm:$0xff] %v2316
      %2387 = vst [vmem:[%s395 + $0xb8] sm:$0xff] %v2321
      %2388 = vst [vmem:[%s395 + $0xc0] sm:$0xff] %v2326
      %2389 = vst [vmem:[%s395 + $0xc8] sm:$0xff] %v2331
      %2390 = vst [vmem:[%s395 + $0xd0] sm:$0xff] %v2336
      %2391 = vst [vmem:[%s395 + $0xd8] sm:$0xff] %v2341
      %2392 = vst [vmem:[%s395 + $0xe0] sm:$0xff] %v2346
      %2393 = vst [vmem:[%s395 + $0xe8] sm:$0xff] %v2351
      %2394 = vst [vmem:[%s395 + $0xf0] sm:$0xff] %v2356
      %2395 = vst [vmem:[%s395 + $0xf8] sm:$0xff] %v2361
      %s2396 = smul.u32 16, %s21
      %p2397 = scmp.lt.s32.totalorder %s20, 1
      %s2398 = scalar_select %p2397, %s20, 1
      %p2399 = scmp.lt.s32.totalorder %s2396, 15
      %s2400 = scalar_select %p2399, %s2396, 15
      %s2401 = smul.addr %s2400, 2
      %s2402 = smul.addr %s2398, 32
      %s2403 = sadd.s32 %s2401, %s2402
      %s2404 = smul.addr %s2403, 8
      %s2405 = scalar_lea.vmem %s5, %s2404
      // Predicated region
      $region41: #{separable_conv.1} parent=39 // pred_check
        %p2406 = pneg %p184
      $region42: #{separable_conv.1} parent=39 // pred_check_branch
        %2408 = sbr.rel (%p2406) target = $region44
      $region43: #{separable_conv.1} parent=39 // pred_region
        %s2409 = smul.u32 16, %s21
      $region44: #{separable_conv.1} parent=39 // pred_fallthru
        _
    $region40: #{separable_conv.1} parent=5 // pred_fallthru
      _
    %p2410 = scmp.le.s32.totalorder 2, %s11
    // Predicated region
    $region45: #{separable_conv.1} parent=5 // pred_check
      %p2411 = pneg %p2410
    $region46: #{separable_conv.1} parent=5 // pred_check_branch
      %2413 = sbr.rel (%p2411) target = $region48
    $region47: #{separable_conv.1} parent=5 // pred_region
      %s2414 = ssub.s32 %s11, 2
      // Predicated region
      $region49: #{separable_conv.1} parent=47 // pred_check
        %p2415 = pneg %p190
      $region50: #{separable_conv.1} parent=47 // pred_check_branch
        %2417 = sbr.rel (%p2415) target = $region52
      $region51: #{separable_conv.1} parent=47 // pred_region
        %s2418 = smul.u32 16, %s23
        %p2419 = scmp.lt.s32.totalorder %s22, 1
        %s2420 = scalar_select %p2419, %s22, 1
        %p2421 = scmp.lt.s32.totalorder %s2418, 15
        %s2422 = scalar_select %p2421, %s2418, 15
        %s2423 = smul.addr %s2422, 2
        %s2424 = smul.addr %s2420, 32
        %s2425 = sadd.s32 %s2423, %s2424
        %s2426 = smul.addr %s2425, 8
        %s2427 = scalar_lea.vmem %s5, %s2426
      $region52: #{separable_conv.1} parent=47 // pred_fallthru
        _
    $region48: #{separable_conv.1} parent=5 // pred_fallthru
      _
  $region6: #{separable_conv.1} parent=0 // loop_footer
    %s15 = sadd.s32 1, %s11
  $region7: #{separable_conv.1} parent=0 // loop_footer_branch
    %10 = sbr.rel target = $region3
  $region8: #{separable_conv.1} parent=0 // loop_exit
    _

</llo_original>
